<compile_context>
chip_gen: v6e
topology: v6e:2x2x1
jax: 0.10.0
libtpu: 0.0.40
codegen_flags: <defaults>
</compile_context>

<pallas_src>
import functools

import jax
import jax.numpy as jnp
import numpy as np
from jax.experimental import pallas as pl
from jax.experimental.pallas import tpu as pltpu

BN_EPS = 1e-5  # torch.nn.BatchNorm2d default


def _round_up(x, m):
    return (x + m - 1) // m * m


def _cdiv(a, b):
    return -(-a // b)


def _vmem_capacity_bytes():
    """Per-core VMEM capacity; conservative fallback if the query fails."""
    try:
        cap = getattr(pltpu.get_tpu_info(), "vmem_capacity_bytes", None)
        if cap:
            return int(cap)
    except Exception:
        pass
    return 64 << 20  # v7x per-TensorCore VMEM (smallest current generation)


def _choose_tile(extent, cap):
    """Lane-tile size (multiple of 128, or the full extent) and tile count."""
    if extent <= cap:
        return extent, 1
    nt = _cdiv(extent, cap)
    tm = _round_up(_cdiv(extent, nt), 128)
    return tm, _cdiv(extent, tm)


# ---------------------------------------------------------------------------
# Pass 1 (tiled path): per-channel statistics via Gram matrix + column sums.
#   xr_ref / xi_ref: (C, TM)      one spatial tile of one batch element
#   gram_ref: (Cin2, Cin2)        per-split resident accumulator
#   sx_ref:   (Cin2, 1)           per-split resident accumulator
# Grid is (nsplit, steps_per_split); the flattened (b, tile) step index is
# g = s*sps + i.  Invalid (overhang) steps and out-of-range lanes are masked.
# ---------------------------------------------------------------------------
def _stats_kernel(xr_ref, xi_ref, gram_ref, sx_ref, *, sps, total, nt, tm, hwf,
                  need_mask):
    i = pl.program_id(1)

    @pl.when(i == 0)
    def _init():
        gram_ref[...] = jnp.zeros_like(gram_ref)
        sx_ref[...] = jnp.zeros_like(sx_ref)

    g = pl.program_id(0) * sps + i

    @pl.when(g < total)
    def _accumulate():
        # [real-block | imag-block] channel stacking happens in VMEM only.
        x = jnp.concatenate([xr_ref[...], xi_ref[...]], axis=0)       # (Cin2, tm)
        if need_mask:
            col = (g % nt) * tm + jax.lax.broadcasted_iota(jnp.int32, x.shape, 1)
            x = jnp.where(col < hwf, x, jnp.zeros_like(x))
        dn = (((1,), (1,)), ((), ()))                                  # x @ x^T
        gram_ref[...] += jax.lax.dot_general(
            x, x, dn, preferred_element_type=jnp.float32)
        ones_v = jnp.ones((x.shape[1], 1), dtype=x.dtype)
        sx_ref[...] += jnp.dot(x, ones_v, preferred_element_type=jnp.float32)


# ---------------------------------------------------------------------------
# Pass 2 (tiled path): 1x1 conv (W @ x) + folded BN affine + ReLU.
#   xr/xi: (C, TM), wr/wi: (Cout2, C), ss: (2, Cout2, 1) = [scale; shift]
#   o_ref: (Cout2, TM)  -- lane-dense f32 stores
# ---------------------------------------------------------------------------
def _conv_bn_relu_kernel(xr_ref, xi_ref, wr_ref, wi_ref, ss_ref, o_ref):
    y = (jnp.dot(wr_ref[...], xr_ref[...], preferred_element_type=jnp.float32)
         + jnp.dot(wi_ref[...], xi_ref[...], preferred_element_type=jnp.float32))
    o_ref[...] = jnp.maximum(y * ss_ref[0] + ss_ref[1], 0.0)


# ---------------------------------------------------------------------------
# Fused fast path (small slabs): stats + BN fold + conv + ReLU in one kernel,
# whole spectral slab resident in VMEM (single HBM read of x, single launch).
# ---------------------------------------------------------------------------
def _fused_kernel(xr_ref, xi_ref, wr_ref, wi_ref, gamma_ref, beta_ref, o_ref):
    nb, c, hwf = xr_ref.shape
    f32 = jnp.float32
    dn = (((1,), (1,)), ((), ()))
    ones_v = jnp.ones((hwf, 1), dtype=xr_ref.dtype)

    grr = jnp.zeros((c, c), f32)
    gri = jnp.zeros((c, c), f32)
    gii = jnp.zeros((c, c), f32)
    sxr = jnp.zeros((c, 1), f32)
    sxi = jnp.zeros((c, 1), f32)
    for b in range(nb):
        xr = xr_ref[b]
        xi = xi_ref[b]
        grr = grr + jax.lax.dot_general(xr, xr, dn, preferred_element_type=f32)
        gri = gri + jax.lax.dot_general(xr, xi, dn, preferred_element_type=f32)
        gii = gii + jax.lax.dot_general(xi, xi, dn, preferred_element_type=f32)
        sxr = sxr + jnp.dot(xr, ones_v, preferred_element_type=f32)
        sxi = sxi + jnp.dot(xi, ones_v, preferred_element_type=f32)

    wr = wr_ref[...]
    wi = wi_ref[...]
    wr32 = wr.astype(f32)
    wi32 = wi.astype(f32)
    sum_y = jnp.dot(wr32, sxr) + jnp.dot(wi32, sxi)                   # (Cout2, 1)
    sumsq = (jnp.sum(jnp.dot(wr32, grr) * wr32, axis=1, keepdims=True)
             + 2.0 * jnp.sum(jnp.dot(wr32, gri) * wi32, axis=1, keepdims=True)
             + jnp.sum(jnp.dot(wi32, gii) * wi32, axis=1, keepdims=True))
    cnt = jnp.float32(nb * hwf)
    mean = sum_y / cnt
    var = jnp.maximum(sumsq / cnt - mean * mean, 0.0)
    scale = gamma_ref[...] * jax.lax.rsqrt(var + BN_EPS)
    shift = beta_ref[...] - mean * scale

    for b in range(nb):
        y = (jnp.dot(wr, xr_ref[b], preferred_element_type=f32)
             + jnp.dot(wi, xi_ref[b], preferred_element_type=f32))
        o_ref[b] = jnp.maximum(y * scale + shift, 0.0)


# ---------------------------------------------------------------------------
# Wrapper: FFT glue in XLA, hot path in Pallas.
# ---------------------------------------------------------------------------
def fourier_unit_forward(x, conv_w, bn_gamma, bn_beta, *, use_bf16_matmul=True,
                         _force_path=None, _max_tile=None):
    """FourierUnit.forward with defaults (groups=1, no SE, no pos-enc,
    2D FFT, fft_norm='ortho', no spatial rescaling), BN in training mode.

    x:        (B, Cin, H, W) float32, NCHW
    conv_w:   (2*Cout, 2*Cin, 1, 1) float32 (Conv2d 1x1, bias=False)
    bn_gamma, bn_beta: (2*Cout,) float32
    returns:  (B, Cout, H, W) float32
    """
    B, C, H, W = x.shape
    Cin2 = 2 * C
    Cout2 = conv_w.shape[0]
    Cout = Cout2 // 2

    # rfft2 over (-2, -1), norm='ortho'
    ff = jnp.fft.rfft2(x.astype(jnp.float32), norm="ortho")          # (B, C, H, Wf)
    Wf = ff.shape[-1]
    HWf = H * Wf

    compute_dtype = jnp.bfloat16 if use_bf16_matmul else jnp.float32
    itemsize = 2 if use_bf16_matmul else 4

    # Real / imag halves fed to Pallas as-is (row-major merge of H,Wf is free);
    # no concat / pad materialization in XLA.
    xr_k = jnp.real(ff).reshape(B, C, HWf).astype(compute_dtype)
    xi_k = jnp.imag(ff).reshape(B, C, HWf).astype(compute_dtype)

    # Weight / BN params: rows permuted from torch's interleaved (re,im,...)
    # output order to [re-block | im-block]; columns split into real / imag
    # input halves.  Tiny, done once.
    perm_out = np.concatenate([np.arange(0, Cout2, 2), np.arange(1, Cout2, 2)])
    w2d = conv_w[:, :, 0, 0].astype(jnp.float32)[perm_out]           # (Cout2, Cin2)
    wr32 = w2d[:, 0::2]                                              # (Cout2, C)
    wi32 = w2d[:, 1::2]                                              # (Cout2, C)
    gamma = bn_gamma.astype(jnp.float32)[perm_out].reshape(Cout2, 1)
    beta = bn_beta.astype(jnp.float32)[perm_out].reshape(Cout2, 1)

    wr_k = wr32.astype(compute_dtype)
    wi_k = wi32.astype(compute_dtype)
    # Fold statistics with the rounded weights so BN stats match the conv.
    wr_f = wr_k.astype(jnp.float32)
    wi_f = wi_k.astype(jnp.float32)

    # ---- generation-aware VMEM budgets.
    vmem_cap = _vmem_capacity_bytes()
    tile_budget = max(4 << 20, min(16 << 20, vmem_cap // 4))
    vmem_limit = int(min(vmem_cap // 2, max(16 << 20, 2 * tile_budget)))

    # ---- small-problem fused fast path.
    fused_need = (B * Cin2 * HWf * itemsize        # xr + xi slabs
                  + B * Cout2 * HWf * 4            # output slab
                  + Cout2 * HWf * 4                # per-batch f32 y temporary
                  + (Cin2 * Cin2 + 4 * Cout2) * 4)
    if _force_path == "fused":
        use_fused = True
    elif _force_path == "tiled":
        use_fused = False
    else:
        use_fused = (fused_need + (2 << 20)) <= vmem_cap // 4

    if use_fused:
        vmem_limit_fused = int(min(vmem_cap // 2, max(16 << 20, 2 * fused_need)))
        y = pl.pallas_call(
            _fused_kernel,
            out_shape=jax.ShapeDtypeStruct((B, Cout2, HWf), jnp.float32),
            compiler_params=pltpu.CompilerParams(
                vmem_limit_bytes=vmem_limit_fused),
        )(xr_k, xi_k, wr_k, wi_k, gamma, beta)
    else:
        # ---- spatial tiling: pass 1 only streams x, so it gets a bigger tile.
        p1_lane = 4 * Cin2 * itemsize                    # db x tiles + temporaries
        p2_lane = 2 * Cin2 * itemsize + 16 * Cout2       # db x tiles + db f32 out
        tm1_cap = max(128, (tile_budget // p1_lane) // 128 * 128)
        tm2_cap = max(128, (tile_budget // p2_lane) // 128 * 128)
        if _max_tile is not None:
            cap_tile = max(128, (_max_tile // 128) * 128)
            tm1_cap = min(tm1_cap, cap_tile)
            tm2_cap = min(tm2_cap, cap_tile)
        tm1, nt1 = _choose_tile(HWf, tm1_cap)
        tm2, nt2 = _choose_tile(HWf, tm2_cap)

        # ---- pass 1: statistics; 2-way split on the flattened (b, tile) space
        #      so v7x megacore can run both splits; partials summed in XLA.
        total1 = B * nt1
        nsplit = 2 if total1 >= 2 else 1
        sps = _cdiv(total1, nsplit)
        need_mask = (nt1 * tm1 != HWf)

        def _x1_map(s, i):
            g = jnp.minimum(s * sps + i, total1 - 1)
            return (g // nt1, 0, g % nt1)

        gram_p, sx_p = pl.pallas_call(
            functools.partial(_stats_kernel, sps=sps, total=total1, nt=nt1,
                              tm=tm1, hwf=HWf, need_mask=need_mask),
            out_shape=(jax.ShapeDtypeStruct((nsplit, Cin2, Cin2), jnp.float32),
                       jax.ShapeDtypeStruct((nsplit, Cin2, 1), jnp.float32)),
            grid=(nsplit, sps),
            in_specs=[pl.BlockSpec((None, C, tm1), _x1_map),
                      pl.BlockSpec((None, C, tm1), _x1_map)],
            out_specs=(pl.BlockSpec((None, Cin2, Cin2), lambda s, i: (s, 0, 0)),
                       pl.BlockSpec((None, Cin2, 1), lambda s, i: (s, 0, 0))),
            compiler_params=pltpu.CompilerParams(
                dimension_semantics=("parallel", "arbitrary"),
                vmem_limit_bytes=vmem_limit),
        )(xr_k, xi_k)
        gram = jnp.sum(gram_p, axis=0)
        sx = jnp.sum(sx_p, axis=0)

        # ---- fold conv weight + BN batch stats into per-channel scale/shift.
        wcat = jnp.concatenate([wr_f, wi_f], axis=1)                  # (Cout2, Cin2)
        count = jnp.float32(B * HWf)                                  # true count
        sum_y = wcat @ sx                                             # (Cout2, 1)
        sumsq_y = jnp.sum((wcat @ gram) * wcat, axis=1, keepdims=True)
        mean = sum_y / count
        var = jnp.maximum(sumsq_y / count - mean * mean, 0.0)         # biased var
        scale = gamma * jax.lax.rsqrt(var + BN_EPS)
        shift = beta - mean * scale
        ss = jnp.stack([scale, shift], axis=0)                        # (2, Cout2, 1)

        # ---- pass 2: conv + BN affine + ReLU, tiled, pipelined, megacore-parallel.
        y = pl.pallas_call(
            _conv_bn_relu_kernel,
            out_shape=jax.ShapeDtypeStruct((B, Cout2, HWf), jnp.float32),
            grid=(B, nt2),
            in_specs=[
                pl.BlockSpec((None, C, tm2), lambda b, t: (b, 0, t)),
                pl.BlockSpec((None, C, tm2), lambda b, t: (b, 0, t)),
                pl.BlockSpec((Cout2, C), lambda b, t: (0, 0)),
                pl.BlockSpec((Cout2, C), lambda b, t: (0, 0)),
                pl.BlockSpec((2, Cout2, 1), lambda b, t: (0, 0, 0)),
            ],
            out_specs=pl.BlockSpec((None, Cout2, tm2), lambda b, t: (b, 0, t)),
            compiler_params=pltpu.CompilerParams(
                dimension_semantics=("parallel", "parallel"),
                vmem_limit_bytes=vmem_limit),
        )(xr_k, xi_k, wr_k, wi_k, ss)

    # ---- reassemble complex ([re-block | im-block] rows) and inverse FFT.
    y = y.reshape(B, Cout2, H, Wf)
    yc = jax.lax.complex(y[:, :Cout], y[:, Cout:])
    out = jnp.fft.irfft2(yc, s=(H, W), norm="ortho")                  # (B, Cout, H, W)
    return out.astype(jnp.float32)

    # TODO(synk): spectral_pos_encoding / use_se / ffc3d / spatial_scale_factor
    # branches are off by default in the module and are not implemented here.


# ---------------------------------------------------------------------------
# Pure-JAX reference (no Pallas) for correctness checking.
# ---------------------------------------------------------------------------
def fourier_unit_reference(x, conv_w, bn_gamma, bn_beta):
    B, C, H, W = x.shape
    ff = jnp.fft.rfft2(x.astype(jnp.float32), norm="ortho")
    Wf = ff.shape[-1]
    stacked = jnp.stack((ff.real, ff.imag), axis=-1)
    stacked = jnp.transpose(stacked, (0, 1, 4, 2, 3)).reshape(B, 2 * C, H, Wf)
    y = jnp.einsum("bchw,oc->bohw", stacked, conv_w[:, :, 0, 0])
    mean = jnp.mean(y, axis=(0, 2, 3), keepdims=True)
    var = jnp.mean(jnp.square(y - mean), axis=(0, 2, 3), keepdims=True)
    y = (y - mean) * jax.lax.rsqrt(var + BN_EPS)
    y = y * bn_gamma[None, :, None, None] + bn_beta[None, :, None, None]
    y = jnp.maximum(y, 0.0)
    Cout = y.shape[1] // 2
    y = y.reshape(B, Cout, 2, H, Wf).transpose(0, 1, 3, 4, 2)
    yc = jax.lax.complex(y[..., 0], y[..., 1])
    return jnp.fft.irfft2(yc, s=(H, W), norm="ortho")


if __name__ == "__main__":
    B, Cin, H, W = 2, 4, 16, 16
    Cout = 4  # out_channels

    key = jax.random.PRNGKey(0)
    kx, kw, kg, kb = jax.random.split(key, 4)

    x = jax.random.normal(kx, (B, Cin, H, W), dtype=jnp.float32)
    # Conv2d(in=2*Cin, out=2*Cout, k=1, bias=False) weight: (2*Cout, 2*Cin, 1, 1)
    conv_w = 0.1 * jax.random.normal(kw, (2 * Cout, 2 * Cin, 1, 1), dtype=jnp.float32)
    # BatchNorm2d(2*Cout) affine params (deterministic, non-trivial)
    bn_gamma = 1.0 + 0.1 * jax.random.normal(kg, (2 * Cout,), dtype=jnp.float32)
    bn_beta = 0.05 * jax.random.normal(kb, (2 * Cout,), dtype=jnp.float32)

    ref = jax.block_until_ready(fourier_unit_reference(x, conv_w, bn_gamma, bn_beta))

    # Exercise both code paths (fused small-problem path and tiled two-pass
    # path with a ragged spatial tail) in both precisions.
    configs = [
        dict(use_bf16_matmul=False, tol=1e-4),                                    # fused, f32
        dict(use_bf16_matmul=False, tol=1e-4, _force_path="tiled", _max_tile=128),  # tiled, f32
        dict(use_bf16_matmul=True, tol=5e-2),                                     # fused, bf16 (default)
        dict(use_bf16_matmul=True, tol=5e-2, _force_path="tiled", _max_tile=128),   # tiled, bf16
    ]
    for cfg in configs:
        tol = cfg.pop("tol")
        fn = jax.jit(functools.partial(fourier_unit_forward, **cfg))
        out = jax.block_until_ready(fn(x, conv_w, bn_gamma, bn_beta))
        assert out.shape == (B, Cout, H, W), out.shape
        np.testing.assert_allclose(np.asarray(out), np.asarray(ref),
                                   rtol=tol, atol=tol)

    print("KERNEL_OK")
</pallas_src>

<mosaic_0001>
module attributes {stable_mosaic.version = 11 : i64} {
  func.func @_fused_kernel(%arg0: memref<2x4x144xf32, #tpu.memory_space<vmem>>, %arg1: memref<2x4x144xf32, #tpu.memory_space<vmem>>, %arg2: memref<8x4xf32, #tpu.memory_space<vmem>>, %arg3: memref<8x4xf32, #tpu.memory_space<vmem>>, %arg4: memref<8x1xf32, #tpu.memory_space<vmem>>, %arg5: memref<8x1xf32, #tpu.memory_space<vmem>>, %arg6: memref<2x8x144xf32, #tpu.memory_space<vmem>>) attributes {dimension_semantics = [], scalar_prefetch = 0 : i64, scratch_operands = 0 : i64, tpu.core_type = #tpu.core_type<tc>} {
    %cst = arith.constant 1.000000e+00 : f32
    %0 = vector.broadcast %cst : f32 to vector<144x1xf32>
    %cst_0 = arith.constant 0.000000e+00 : f32
    %1 = vector.broadcast %cst_0 : f32 to vector<4x4xf32>
    %cst_1 = arith.constant 0.000000e+00 : f32
    %2 = vector.broadcast %cst_1 : f32 to vector<4x4xf32>
    %cst_2 = arith.constant 0.000000e+00 : f32
    %3 = vector.broadcast %cst_2 : f32 to vector<4x4xf32>
    %cst_3 = arith.constant 0.000000e+00 : f32
    %4 = vector.broadcast %cst_3 : f32 to vector<4x1xf32>
    %cst_4 = arith.constant 0.000000e+00 : f32
    %5 = vector.broadcast %cst_4 : f32 to vector<4x1xf32>
    %c0 = arith.constant 0 : index
    %c0_5 = arith.constant 0 : index
    %c0_6 = arith.constant 0 : index
    %6 = vector.load %arg0[%c0, %c0_5, %c0_6] : memref<2x4x144xf32, #tpu.memory_space<vmem>>, vector<1x4x144xf32>
    %7 = vector.shape_cast %6 : vector<1x4x144xf32> to vector<4x144xf32>
    %c0_7 = arith.constant 0 : index
    %c0_8 = arith.constant 0 : index
    %c0_9 = arith.constant 0 : index
    %8 = vector.load %arg1[%c0_7, %c0_8, %c0_9] : memref<2x4x144xf32, #tpu.memory_space<vmem>>, vector<1x4x144xf32>
    %9 = vector.shape_cast %8 : vector<1x4x144xf32> to vector<4x144xf32>
    %cst_10 = arith.constant dense<0.000000e+00> : vector<4x4xf32>
    %10 = tpu.matmul %7, %7, %cst_10 {dimension_numbers = #tpu.dot_dimension_numbers<[1], [1], [0], [0], [0, 0, 1, 0], [], []>} : vector<4x144xf32>, vector<4x144xf32>, vector<4x4xf32> -> vector<4x4xf32>
    %11 = arith.addf %1, %10 : vector<4x4xf32>
    %cst_11 = arith.constant dense<0.000000e+00> : vector<4x4xf32>
    %12 = tpu.matmul %7, %9, %cst_11 {dimension_numbers = #tpu.dot_dimension_numbers<[1], [1], [0], [0], [0, 0, 1, 0], [], []>} : vector<4x144xf32>, vector<4x144xf32>, vector<4x4xf32> -> vector<4x4xf32>
    %13 = arith.addf %2, %12 : vector<4x4xf32>
    %cst_12 = arith.constant dense<0.000000e+00> : vector<4x4xf32>
    %14 = tpu.matmul %9, %9, %cst_12 {dimension_numbers = #tpu.dot_dimension_numbers<[1], [1], [0], [0], [0, 0, 1, 0], [], []>} : vector<4x144xf32>, vector<4x144xf32>, vector<4x4xf32> -> vector<4x4xf32>
    %15 = arith.addf %3, %14 : vector<4x4xf32>
    %cst_13 = arith.constant dense<0.000000e+00> : vector<4x1xf32>
    %16 = tpu.matmul %7, %0, %cst_13 {dimension_numbers = #tpu.dot_dimension_numbers<[1], [0], [0], [1], [0, 0, 1, 1], [], []>} : vector<4x144xf32>, vector<144x1xf32>, vector<4x1xf32> -> vector<4x1xf32>
    %17 = arith.addf %4, %16 : vector<4x1xf32>
    %cst_14 = arith.constant dense<0.000000e+00> : vector<4x1xf32>
    %18 = tpu.matmul %9, %0, %cst_14 {dimension_numbers = #tpu.dot_dimension_numbers<[1], [0], [0], [1], [0, 0, 1, 1], [], []>} : vector<4x144xf32>, vector<144x1xf32>, vector<4x1xf32> -> vector<4x1xf32>
    %19 = arith.addf %5, %18 : vector<4x1xf32>
    %c1 = arith.constant 1 : index
    %c0_15 = arith.constant 0 : index
    %c0_16 = arith.constant 0 : index
    %20 = vector.load %arg0[%c1, %c0_15, %c0_16] : memref<2x4x144xf32, #tpu.memory_space<vmem>>, vector<1x4x144xf32>
    %21 = vector.shape_cast %20 : vector<1x4x144xf32> to vector<4x144xf32>
    %c1_17 = arith.constant 1 : index
    %c0_18 = arith.constant 0 : index
    %c0_19 = arith.constant 0 : index
    %22 = vector.load %arg1[%c1_17, %c0_18, %c0_19] : memref<2x4x144xf32, #tpu.memory_space<vmem>>, vector<1x4x144xf32>
    %23 = vector.shape_cast %22 : vector<1x4x144xf32> to vector<4x144xf32>
    %cst_20 = arith.constant dense<0.000000e+00> : vector<4x4xf32>
    %24 = tpu.matmul %21, %21, %cst_20 {dimension_numbers = #tpu.dot_dimension_numbers<[1], [1], [0], [0], [0, 0, 1, 0], [], []>} : vector<4x144xf32>, vector<4x144xf32>, vector<4x4xf32> -> vector<4x4xf32>
    %25 = arith.addf %11, %24 : vector<4x4xf32>
    %cst_21 = arith.constant dense<0.000000e+00> : vector<4x4xf32>
    %26 = tpu.matmul %21, %23, %cst_21 {dimension_numbers = #tpu.dot_dimension_numbers<[1], [1], [0], [0], [0, 0, 1, 0], [], []>} : vector<4x144xf32>, vector<4x144xf32>, vector<4x4xf32> -> vector<4x4xf32>
    %27 = arith.addf %13, %26 : vector<4x4xf32>
    %cst_22 = arith.constant dense<0.000000e+00> : vector<4x4xf32>
    %28 = tpu.matmul %23, %23, %cst_22 {dimension_numbers = #tpu.dot_dimension_numbers<[1], [1], [0], [0], [0, 0, 1, 0], [], []>} : vector<4x144xf32>, vector<4x144xf32>, vector<4x4xf32> -> vector<4x4xf32>
    %29 = arith.addf %15, %28 : vector<4x4xf32>
    %cst_23 = arith.constant dense<0.000000e+00> : vector<4x1xf32>
    %30 = tpu.matmul %21, %0, %cst_23 {dimension_numbers = #tpu.dot_dimension_numbers<[1], [0], [0], [1], [0, 0, 1, 1], [], []>} : vector<4x144xf32>, vector<144x1xf32>, vector<4x1xf32> -> vector<4x1xf32>
    %31 = arith.addf %17, %30 : vector<4x1xf32>
    %cst_24 = arith.constant dense<0.000000e+00> : vector<4x1xf32>
    %32 = tpu.matmul %23, %0, %cst_24 {dimension_numbers = #tpu.dot_dimension_numbers<[1], [0], [0], [1], [0, 0, 1, 1], [], []>} : vector<4x144xf32>, vector<144x1xf32>, vector<4x1xf32> -> vector<4x1xf32>
    %33 = arith.addf %19, %32 : vector<4x1xf32>
    %c0_25 = arith.constant 0 : index
    %c0_26 = arith.constant 0 : index
    %34 = vector.load %arg2[%c0_25, %c0_26] : memref<8x4xf32, #tpu.memory_space<vmem>>, vector<8x4xf32>
    %c0_27 = arith.constant 0 : index
    %c0_28 = arith.constant 0 : index
    %35 = vector.load %arg3[%c0_27, %c0_28] : memref<8x4xf32, #tpu.memory_space<vmem>>, vector<8x4xf32>
    %cst_29 = arith.constant dense<0.000000e+00> : vector<8x1xf32>
    %36 = tpu.matmul %34, %31, %cst_29 {dimension_numbers = #tpu.dot_dimension_numbers<[1], [0], [0], [1], [0, 0, 1, 1], [], []>} : vector<8x4xf32>, vector<4x1xf32>, vector<8x1xf32> -> vector<8x1xf32>
    %cst_30 = arith.constant dense<0.000000e+00> : vector<8x1xf32>
    %37 = tpu.matmul %35, %33, %cst_30 {dimension_numbers = #tpu.dot_dimension_numbers<[1], [0], [0], [1], [0, 0, 1, 1], [], []>} : vector<8x4xf32>, vector<4x1xf32>, vector<8x1xf32> -> vector<8x1xf32>
    %38 = arith.addf %36, %37 : vector<8x1xf32>
    %cst_31 = arith.constant dense<0.000000e+00> : vector<8x4xf32>
    %39 = tpu.matmul %34, %25, %cst_31 {dimension_numbers = #tpu.dot_dimension_numbers<[1], [0], [0], [1], [0, 0, 1, 1], [], []>} : vector<8x4xf32>, vector<4x4xf32>, vector<8x4xf32> -> vector<8x4xf32>
    %40 = arith.mulf %39, %34 : vector<8x4xf32>
    %cst_32 = arith.constant dense<0.000000e+00> : vector<8xf32>
    %41 = vector.multi_reduction <add>, %40, %cst_32 [1] : vector<8x4xf32> to vector<8xf32>
    %42 = vector.shape_cast %41 : vector<8xf32> to vector<8x1xf32>
    %cst_33 = arith.constant dense<0.000000e+00> : vector<8x4xf32>
    %43 = tpu.matmul %34, %27, %cst_33 {dimension_numbers = #tpu.dot_dimension_numbers<[1], [0], [0], [1], [0, 0, 1, 1], [], []>} : vector<8x4xf32>, vector<4x4xf32>, vector<8x4xf32> -> vector<8x4xf32>
    %44 = arith.mulf %43, %35 : vector<8x4xf32>
    %cst_34 = arith.constant dense<0.000000e+00> : vector<8xf32>
    %45 = vector.multi_reduction <add>, %44, %cst_34 [1] : vector<8x4xf32> to vector<8xf32>
    %46 = vector.shape_cast %45 : vector<8xf32> to vector<8x1xf32>
    %cst_35 = arith.constant 2.000000e+00 : f32
    %47 = vector.broadcast %cst_35 : f32 to vector<8x1xf32>
    %48 = arith.mulf %47, %46 : vector<8x1xf32>
    %49 = arith.addf %42, %48 : vector<8x1xf32>
    %cst_36 = arith.constant dense<0.000000e+00> : vector<8x4xf32>
    %50 = tpu.matmul %35, %29, %cst_36 {dimension_numbers = #tpu.dot_dimension_numbers<[1], [0], [0], [1], [0, 0, 1, 1], [], []>} : vector<8x4xf32>, vector<4x4xf32>, vector<8x4xf32> -> vector<8x4xf32>
    %51 = arith.mulf %50, %35 : vector<8x4xf32>
    %cst_37 = arith.constant dense<0.000000e+00> : vector<8xf32>
    %52 = vector.multi_reduction <add>, %51, %cst_37 [1] : vector<8x4xf32> to vector<8xf32>
    %53 = vector.shape_cast %52 : vector<8xf32> to vector<8x1xf32>
    %54 = arith.addf %49, %53 : vector<8x1xf32>
    %cst_38 = arith.constant 2.880000e+02 : f32
    %55 = vector.broadcast %cst_38 : f32 to vector<8x1xf32>
    %56 = arith.divf %38, %55 : vector<8x1xf32>
    %cst_39 = arith.constant 2.880000e+02 : f32
    %57 = vector.broadcast %cst_39 : f32 to vector<8x1xf32>
    %58 = arith.divf %54, %57 : vector<8x1xf32>
    %59 = arith.mulf %56, %56 : vector<8x1xf32>
    %60 = arith.subf %58, %59 : vector<8x1xf32>
    %cst_40 = arith.constant 0.000000e+00 : f32
    %61 = vector.broadcast %cst_40 : f32 to vector<8x1xf32>
    %62 = arith.maximumf %60, %61 : vector<8x1xf32>
    %c0_41 = arith.constant 0 : index
    %c0_42 = arith.constant 0 : index
    %63 = vector.load %arg4[%c0_41, %c0_42] : memref<8x1xf32, #tpu.memory_space<vmem>>, vector<8x1xf32>
    %cst_43 = arith.constant 9.99999974E-6 : f32
    %64 = vector.broadcast %cst_43 : f32 to vector<8x1xf32>
    %65 = arith.addf %62, %64 : vector<8x1xf32>
    %66 = math.rsqrt %65 : vector<8x1xf32>
    %67 = arith.mulf %63, %66 : vector<8x1xf32>
    %c0_44 = arith.constant 0 : index
    %c0_45 = arith.constant 0 : index
    %68 = vector.load %arg5[%c0_44, %c0_45] : memref<8x1xf32, #tpu.memory_space<vmem>>, vector<8x1xf32>
    %69 = arith.mulf %56, %67 : vector<8x1xf32>
    %70 = arith.subf %68, %69 : vector<8x1xf32>
    %c0_46 = arith.constant 0 : index
    %c0_47 = arith.constant 0 : index
    %c0_48 = arith.constant 0 : index
    %71 = vector.load %arg0[%c0_46, %c0_47, %c0_48] : memref<2x4x144xf32, #tpu.memory_space<vmem>>, vector<1x4x144xf32>
    %72 = vector.shape_cast %71 : vector<1x4x144xf32> to vector<4x144xf32>
    %cst_49 = arith.constant dense<0.000000e+00> : vector<8x144xf32>
    %73 = tpu.matmul %34, %72, %cst_49 {dimension_numbers = #tpu.dot_dimension_numbers<[1], [0], [0], [1], [0, 0, 1, 1], [], []>} : vector<8x4xf32>, vector<4x144xf32>, vector<8x144xf32> -> vector<8x144xf32>
    %c0_50 = arith.constant 0 : index
    %c0_51 = arith.constant 0 : index
    %c0_52 = arith.constant 0 : index
    %74 = vector.load %arg1[%c0_50, %c0_51, %c0_52] : memref<2x4x144xf32, #tpu.memory_space<vmem>>, vector<1x4x144xf32>
    %75 = vector.shape_cast %74 : vector<1x4x144xf32> to vector<4x144xf32>
    %cst_53 = arith.constant dense<0.000000e+00> : vector<8x144xf32>
    %76 = tpu.matmul %35, %75, %cst_53 {dimension_numbers = #tpu.dot_dimension_numbers<[1], [0], [0], [1], [0, 0, 1, 1], [], []>} : vector<8x4xf32>, vector<4x144xf32>, vector<8x144xf32> -> vector<8x144xf32>
    %77 = arith.addf %73, %76 : vector<8x144xf32>
    %78 = vector.broadcast %67 : vector<8x1xf32> to vector<8x144xf32>
    %79 = arith.mulf %77, %78 : vector<8x144xf32>
    %80 = vector.broadcast %70 : vector<8x1xf32> to vector<8x144xf32>
    %81 = arith.addf %79, %80 : vector<8x144xf32>
    %cst_54 = arith.constant 0.000000e+00 : f32
    %82 = vector.broadcast %cst_54 : f32 to vector<8x144xf32>
    %83 = arith.maximumf %81, %82 : vector<8x144xf32>
    %c0_55 = arith.constant 0 : index
    %c0_56 = arith.constant 0 : index
    %c0_57 = arith.constant 0 : index
    %84 = vector.load %arg6[%c0_55, %c0_56, %c0_57] : memref<2x8x144xf32, #tpu.memory_space<vmem>>, vector<1x8x144xf32>
    %85 = vector.shape_cast %84 : vector<1x8x144xf32> to vector<8x144xf32>
    %86 = vector.shape_cast %83 : vector<8x144xf32> to vector<1x8x144xf32>
    tpu.vector_store %arg6[%c0_55, %c0_56, %c0_57], %86 {strides = array<i32>} : memref<2x8x144xf32, #tpu.memory_space<vmem>>, vector<1x8x144xf32>,
    %c1_58 = arith.constant 1 : index
    %c0_59 = arith.constant 0 : index
    %c0_60 = arith.constant 0 : index
    %87 = vector.load %arg0[%c1_58, %c0_59, %c0_60] : memref<2x4x144xf32, #tpu.memory_space<vmem>>, vector<1x4x144xf32>
    %88 = vector.shape_cast %87 : vector<1x4x144xf32> to vector<4x144xf32>
    %cst_61 = arith.constant dense<0.000000e+00> : vector<8x144xf32>
    %89 = tpu.matmul %34, %88, %cst_61 {dimension_numbers = #tpu.dot_dimension_numbers<[1], [0], [0], [1], [0, 0, 1, 1], [], []>} : vector<8x4xf32>, vector<4x144xf32>, vector<8x144xf32> -> vector<8x144xf32>
    %c1_62 = arith.constant 1 : index
    %c0_63 = arith.constant 0 : index
    %c0_64 = arith.constant 0 : index
    %90 = vector.load %arg1[%c1_62, %c0_63, %c0_64] : memref<2x4x144xf32, #tpu.memory_space<vmem>>, vector<1x4x144xf32>
    %91 = vector.shape_cast %90 : vector<1x4x144xf32> to vector<4x144xf32>
    %cst_65 = arith.constant dense<0.000000e+00> : vector<8x144xf32>
    %92 = tpu.matmul %35, %91, %cst_65 {dimension_numbers = #tpu.dot_dimension_numbers<[1], [0], [0], [1], [0, 0, 1, 1], [], []>} : vector<8x4xf32>, vector<4x144xf32>, vector<8x144xf32> -> vector<8x144xf32>
    %93 = arith.addf %89, %92 : vector<8x144xf32>
    %94 = vector.broadcast %67 : vector<8x1xf32> to vector<8x144xf32>
    %95 = arith.mulf %93, %94 : vector<8x144xf32>
    %96 = vector.broadcast %70 : vector<8x1xf32> to vector<8x144xf32>
    %97 = arith.addf %95, %96 : vector<8x144xf32>
    %cst_66 = arith.constant 0.000000e+00 : f32
    %98 = vector.broadcast %cst_66 : f32 to vector<8x144xf32>
    %99 = arith.maximumf %97, %98 : vector<8x144xf32>
    %c1_67 = arith.constant 1 : index
    %c0_68 = arith.constant 0 : index
    %c0_69 = arith.constant 0 : index
    %100 = vector.load %arg6[%c1_67, %c0_68, %c0_69] : memref<2x8x144xf32, #tpu.memory_space<vmem>>, vector<1x8x144xf32>
    %101 = vector.shape_cast %100 : vector<1x8x144xf32> to vector<8x144xf32>
    %102 = vector.shape_cast %99 : vector<8x144xf32> to vector<1x8x144xf32>
    tpu.vector_store %arg6[%c1_67, %c0_68, %c0_69], %102 {strides = array<i32>} : memref<2x8x144xf32, #tpu.memory_space<vmem>>, vector<1x8x144xf32>,
    return
  }
}

</mosaic_0001>

<llo_original>
// kernel: reverse.0
$region0: #{reverse.0}
  %s0 = inlined_call_operand.vmem [shape: f32[2,4,16,7], index: 0, kind: input, shape index: {}]
  %s1 = inlined_call_operand.vmem [shape: f32[2,4,16,7], index: 1, kind: output, shape index: {}]
  $region1: #{reverse.0} parent=0
    #allocation0 [shape = 'u8[65536]{0}', space=vmem, size = 0x10000, scoped, tag = 'operand span for operand 0']
    #allocation1 [shape = 'u8[32768]{0}', space=vmem, size = 0x8000, scoped, tag = 'operand span for operand 1']
    %s2 = scalar_lea.vmem [#allocation0], 8
    // Predicated region
    $region2: #{reverse.0} parent=1 // pred_check
      _
    $region3: #{reverse.0} parent=1 // pred_check_branch
      %4 = sbr.rel (0) target = $region5
    $region4: #{reverse.0} parent=1 // pred_region
      // Predicated region
      $region6: #{reverse.0} parent=4 // pred_check
        _
      $region7: #{reverse.0} parent=4 // pred_check_branch
        %6 = sbr.rel (0) target = $region9
      $region8: #{reverse.0} parent=4 // pred_region
        // Predicated region
        $region21: #{reverse.0} parent=8 // pred_check
          _
        $region22: #{reverse.0} parent=8 // pred_check_branch
          %36 = sbr.rel (0) target = $region24
        $region23: #{reverse.0} parent=8 // pred_region
          loop: start=0, step=1, limit=1
          $region25: #{reverse.0} parent=23 // loop_pre_header
            _
          $region26: #{reverse.0} parent=23 // loop_header
            %s38 = sphi 0, %s42
            %p39 = scmp.ge.s32.totalorder %s38, 1
            %s43 = sphi %s0, %s0
            %s44 = sphi %s2, %s2
          $region27: #{reverse.0} parent=23 // loop_header_branch
            %41 = sbr.rel (%p39) target = $region31
          $region28: #{reverse.0} parent=23 // loop_body
            %v45 = vld [vmem:[%s43] sm:$0xff]
            %46 = vst [vmem:[%s44] sm:$0xff] %v45
            %v47 = vld [vmem:[%s43 + $0x8] sm:$0xff]
            %48 = vst [vmem:[%s44 + $0x10] sm:$0xff] %v47
            %v49 = vld [vmem:[%s43 + $0x10] sm:$0xff]
            %50 = vst [vmem:[%s44 + $0x20] sm:$0xff] %v49
            %v51 = vld [vmem:[%s43 + $0x18] sm:$0xff]
            %52 = vst [vmem:[%s44 + $0x30] sm:$0xff] %v51
            %v53 = vld [vmem:[%s43 + $0x20] sm:$0xff]
            %54 = vst [vmem:[%s44 + $0x40] sm:$0xff] %v53
            %v55 = vld [vmem:[%s43 + $0x28] sm:$0xff]
            %56 = vst [vmem:[%s44 + $0x50] sm:$0xff] %v55
            %v57 = vld [vmem:[%s43 + $0x30] sm:$0xff]
            %58 = vst [vmem:[%s44 + $0x60] sm:$0xff] %v57
            %v59 = vld [vmem:[%s43 + $0x38] sm:$0xff]
            %60 = vst [vmem:[%s44 + $0x70] sm:$0xff] %v59
          $region29: #{reverse.0} parent=23 // loop_footer
            %s42 = sadd.s32 1, %s38
          $region30: #{reverse.0} parent=23 // loop_footer_branch
            %37 = sbr.rel target = $region26
          $region31: #{reverse.0} parent=23 // loop_exit
            _
        $region24: #{reverse.0} parent=8 // pred_fallthru
          _
        // Predicated region
        $region32: #{reverse.0} parent=8 // pred_check
          _
        $region33: #{reverse.0} parent=8 // pred_check_branch
          %62 = sbr.rel target = $region35
        $region34: #{reverse.0} parent=8 // pred_region
          _
        $region35: #{reverse.0} parent=8 // pred_fallthru
          _
      $region9: #{reverse.0} parent=4 // pred_fallthru
        _
      // Predicated region
      $region10: #{reverse.0} parent=4 // pred_check
        _
      $region11: #{reverse.0} parent=4 // pred_check_branch
        %8 = sbr.rel target = $region13
      $region12: #{reverse.0} parent=4 // pred_region
        %s10 = ssub.s32 256, 1
        loop: start=0, step=1, limit=1
        $region14: #{reverse.0} parent=12 // loop_pre_header
          _
        $region15: #{reverse.0} parent=12 // loop_header
          %s12 = sphi 0, %s16
          %p13 = scmp.ge.s32.totalorder %s12, 1
          %s17 = sphi %s0, %s0
          %s18 = sphi %s2, %s2
        $region16: #{reverse.0} parent=12 // loop_header_branch
          %15 = sbr.rel (%p13) target = $region20
        $region17: #{reverse.0} parent=12 // loop_body
          %v19 = vld [vmem:[%s17] sm:%s10]
          %20 = vst [vmem:[%s18] sm:%s10] %v19
          %v21 = vld [vmem:[%s17 + $0x8] sm:%s10]
          %22 = vst [vmem:[%s18 + $0x10] sm:%s10] %v21
          %v23 = vld [vmem:[%s17 + $0x10] sm:%s10]
          %24 = vst [vmem:[%s18 + $0x20] sm:%s10] %v23
          %v25 = vld [vmem:[%s17 + $0x18] sm:%s10]
          %26 = vst [vmem:[%s18 + $0x30] sm:%s10] %v25
          %v27 = vld [vmem:[%s17 + $0x20] sm:%s10]
          %28 = vst [vmem:[%s18 + $0x40] sm:%s10] %v27
          %v29 = vld [vmem:[%s17 + $0x28] sm:%s10]
          %30 = vst [vmem:[%s18 + $0x50] sm:%s10] %v29
          %v31 = vld [vmem:[%s17 + $0x30] sm:%s10]
          %32 = vst [vmem:[%s18 + $0x60] sm:%s10] %v31
          %v33 = vld [vmem:[%s17 + $0x38] sm:%s10]
          %34 = vst [vmem:[%s18 + $0x70] sm:%s10] %v33
        $region18: #{reverse.0} parent=12 // loop_footer
          %s16 = sadd.s32 1, %s12
        $region19: #{reverse.0} parent=12 // loop_footer_branch
          %11 = sbr.rel target = $region15
        $region20: #{reverse.0} parent=12 // loop_exit
          _
      $region13: #{reverse.0} parent=4 // pred_fallthru
        _
    $region5: #{reverse.0} parent=1 // pred_fallthru
      _
    %63 = vnop
    %s64 = scalar_lea.vmem [#allocation0], 7
    %v65 = vld [vmem:[%s64] ss:$-1 sm:$0xff]
    %v66 = vrot.slane %v65, 1
    %67 = vst [vmem:[#allocation1] sm:$0xff] %v66
    %s68 = scalar_lea.vmem [#allocation0], 8
    %s69 = scalar_lea.vmem %s68, 7 [#allocation0]
    %v70 = vld [vmem:[%s69] ss:$-1 sm:$0xff]
    %v71 = vrot.slane %v70, 1
    %v72 = vlaneseq
    %v73 = vshrl.u32 %v72, 7
    %vm74 = vcmp.lt.s32.totalorder %v73, 7
    %75 = vst.msk [vmem:[#allocation1] sm:$0xff] %vm74, %v71
    %s76 = scalar_lea.vmem [#allocation1], 8
    %s77 = scalar_lea.vmem [#allocation0], 16
    %s78 = scalar_lea.vmem %s77, 7 [#allocation0]
    %v79 = vld [vmem:[%s78] ss:$-1 sm:$0xff]
    %v80 = vrot.slane %v79, 1
    %81 = vst [vmem:[%s76] sm:$0xff] %v80
    %s82 = scalar_lea.vmem %s77, 8 [#allocation0]
    %s83 = scalar_lea.vmem %s82, 7 [#allocation0]
    %v84 = vld [vmem:[%s83] ss:$-1 sm:$0xff]
    %v85 = vrot.slane %v84, 1
    %v86 = vlaneseq
    %v87 = vshrl.u32 %v86, 7
    %vm88 = vcmp.lt.s32.totalorder %v87, 7
    %89 = vst.msk [vmem:[%s76] sm:$0xff] %vm88, %v85
    %s90 = scalar_lea.vmem [#allocation1], 16
    %s91 = scalar_lea.vmem [#allocation0], 32
    %s92 = scalar_lea.vmem %s91, 7 [#allocation0]
    %v93 = vld [vmem:[%s92] ss:$-1 sm:$0xff]
    %v94 = vrot.slane %v93, 1
    %95 = vst [vmem:[%s90] sm:$0xff] %v94
    %s96 = scalar_lea.vmem %s91, 8 [#allocation0]
    %s97 = scalar_lea.vmem %s96, 7 [#allocation0]
    %v98 = vld [vmem:[%s97] ss:$-1 sm:$0xff]
    %v99 = vrot.slane %v98, 1
    %v100 = vlaneseq
    %v101 = vshrl.u32 %v100, 7
    %vm102 = vcmp.lt.s32.totalorder %v101, 7
    %103 = vst.msk [vmem:[%s90] sm:$0xff] %vm102, %v99
    %s104 = scalar_lea.vmem [#allocation1], 24
    %s105 = scalar_lea.vmem [#allocation0], 48
    %s106 = scalar_lea.vmem %s105, 7 [#allocation0]
    %v107 = vld [vmem:[%s106] ss:$-1 sm:$0xff]
    %v108 = vrot.slane %v107, 1
    %109 = vst [vmem:[%s104] sm:$0xff] %v108
    %s110 = scalar_lea.vmem %s105, 8 [#allocation0]
    %s111 = scalar_lea.vmem %s110, 7 [#allocation0]
    %v112 = vld [vmem:[%s111] ss:$-1 sm:$0xff]
    %v113 = vrot.slane %v112, 1
    %v114 = vlaneseq
    %v115 = vshrl.u32 %v114, 7
    %vm116 = vcmp.lt.s32.totalorder %v115, 7
    %117 = vst.msk [vmem:[%s104] sm:$0xff] %vm116, %v113
    %s118 = scalar_lea.vmem [#allocation1], 32
    %s119 = scalar_lea.vmem [#allocation0], 64
    %s120 = scalar_lea.vmem %s119, 7 [#allocation0]
    %v121 = vld [vmem:[%s120] ss:$-1 sm:$0xff]
    %v122 = vrot.slane %v121, 1
    %123 = vst [vmem:[%s118] sm:$0xff] %v122
    %s124 = scalar_lea.vmem %s119, 8 [#allocation0]
    %s125 = scalar_lea.vmem %s124, 7 [#allocation0]
    %v126 = vld [vmem:[%s125] ss:$-1 sm:$0xff]
    %v127 = vrot.slane %v126, 1
    %v128 = vlaneseq
    %v129 = vshrl.u32 %v128, 7
    %vm130 = vcmp.lt.s32.totalorder %v129, 7
    %131 = vst.msk [vmem:[%s118] sm:$0xff] %vm130, %v127
    %s132 = scalar_lea.vmem [#allocation1], 40
    %s133 = scalar_lea.vmem [#allocation0], 80
    %s134 = scalar_lea.vmem %s133, 7 [#allocation0]
    %v135 = vld [vmem:[%s134] ss:$-1 sm:$0xff]
    %v136 = vrot.slane %v135, 1
    %137 = vst [vmem:[%s132] sm:$0xff] %v136
    %s138 = scalar_lea.vmem %s133, 8 [#allocation0]
    %s139 = scalar_lea.vmem %s138, 7 [#allocation0]
    %v140 = vld [vmem:[%s139] ss:$-1 sm:$0xff]
    %v141 = vrot.slane %v140, 1
    %v142 = vlaneseq
    %v143 = vshrl.u32 %v142, 7
    %vm144 = vcmp.lt.s32.totalorder %v143, 7
    %145 = vst.msk [vmem:[%s132] sm:$0xff] %vm144, %v141
    %s146 = scalar_lea.vmem [#allocation1], 48
    %s147 = scalar_lea.vmem [#allocation0], 96
    %s148 = scalar_lea.vmem %s147, 7 [#allocation0]
    %v149 = vld [vmem:[%s148] ss:$-1 sm:$0xff]
    %v150 = vrot.slane %v149, 1
    %151 = vst [vmem:[%s146] sm:$0xff] %v150
    %s152 = scalar_lea.vmem %s147, 8 [#allocation0]
    %s153 = scalar_lea.vmem %s152, 7 [#allocation0]
    %v154 = vld [vmem:[%s153] ss:$-1 sm:$0xff]
    %v155 = vrot.slane %v154, 1
    %v156 = vlaneseq
    %v157 = vshrl.u32 %v156, 7
    %vm158 = vcmp.lt.s32.totalorder %v157, 7
    %159 = vst.msk [vmem:[%s146] sm:$0xff] %vm158, %v155
    %s160 = scalar_lea.vmem [#allocation1], 56
    %s161 = scalar_lea.vmem [#allocation0], 112
    %s162 = scalar_lea.vmem %s161, 7 [#allocation0]
    %v163 = vld [vmem:[%s162] ss:$-1 sm:$0xff]
    %v164 = vrot.slane %v163, 1
    %165 = vst [vmem:[%s160] sm:$0xff] %v164
    %s166 = scalar_lea.vmem %s161, 8 [#allocation0]
    %s167 = scalar_lea.vmem %s166, 7 [#allocation0]
    %v168 = vld [vmem:[%s167] ss:$-1 sm:$0xff]
    %v169 = vrot.slane %v168, 1
    %v170 = vlaneseq
    %v171 = vshrl.u32 %v170, 7
    %vm172 = vcmp.lt.s32.totalorder %v171, 7
    %173 = vst.msk [vmem:[%s160] sm:$0xff] %vm172, %v169
    // Predicated region
    $region36: #{reverse.0} parent=1 // pred_check
      _
    $region37: #{reverse.0} parent=1 // pred_check_branch
      %175 = sbr.rel (0) target = $region39
    $region38: #{reverse.0} parent=1 // pred_region
      // Predicated region
      $region40: #{reverse.0} parent=38 // pred_check
        _
      $region41: #{reverse.0} parent=38 // pred_check_branch
        %177 = sbr.rel (0) target = $region43
      $region42: #{reverse.0} parent=38 // pred_region
        // Predicated region
        $region55: #{reverse.0} parent=42 // pred_check
          _
        $region56: #{reverse.0} parent=42 // pred_check_branch
          %207 = sbr.rel (0) target = $region58
        $region57: #{reverse.0} parent=42 // pred_region
          loop: start=0, step=1, limit=1
          $region59: #{reverse.0} parent=57 // loop_pre_header
            _
          $region60: #{reverse.0} parent=57 // loop_header
            %s209 = sphi 0, %s213
            %p210 = scmp.ge.s32.totalorder %s209, 1
            %s214 = sphi [#allocation1], [#allocation1]
            %s215 = sphi %s1, %s1
          $region61: #{reverse.0} parent=57 // loop_header_branch
            %212 = sbr.rel (%p210) target = $region65
          $region62: #{reverse.0} parent=57 // loop_body
            %v216 = vld [vmem:[%s214] sm:$0xff]
            %217 = vst [vmem:[%s215] sm:$0xff] %v216
            %v218 = vld [vmem:[%s214 + $0x8] sm:$0xff]
            %219 = vst [vmem:[%s215 + $0x8] sm:$0xff] %v218
            %v220 = vld [vmem:[%s214 + $0x10] sm:$0xff]
            %221 = vst [vmem:[%s215 + $0x10] sm:$0xff] %v220
            %v222 = vld [vmem:[%s214 + $0x18] sm:$0xff]
            %223 = vst [vmem:[%s215 + $0x18] sm:$0xff] %v222
            %v224 = vld [vmem:[%s214 + $0x20] sm:$0xff]
            %225 = vst [vmem:[%s215 + $0x20] sm:$0xff] %v224
            %v226 = vld [vmem:[%s214 + $0x28] sm:$0xff]
            %227 = vst [vmem:[%s215 + $0x28] sm:$0xff] %v226
            %v228 = vld [vmem:[%s214 + $0x30] sm:$0xff]
            %229 = vst [vmem:[%s215 + $0x30] sm:$0xff] %v228
            %v230 = vld [vmem:[%s214 + $0x38] sm:$0xff]
            %231 = vst [vmem:[%s215 + $0x38] sm:$0xff] %v230
          $region63: #{reverse.0} parent=57 // loop_footer
            %s213 = sadd.s32 1, %s209
          $region64: #{reverse.0} parent=57 // loop_footer_branch
            %208 = sbr.rel target = $region60
          $region65: #{reverse.0} parent=57 // loop_exit
            _
        $region58: #{reverse.0} parent=42 // pred_fallthru
          _
        // Predicated region
        $region66: #{reverse.0} parent=42 // pred_check
          _
        $region67: #{reverse.0} parent=42 // pred_check_branch
          %233 = sbr.rel target = $region69
        $region68: #{reverse.0} parent=42 // pred_region
          _
        $region69: #{reverse.0} parent=42 // pred_fallthru
          _
      $region43: #{reverse.0} parent=38 // pred_fallthru
        _
      // Predicated region
      $region44: #{reverse.0} parent=38 // pred_check
        _
      $region45: #{reverse.0} parent=38 // pred_check_branch
        %179 = sbr.rel target = $region47
      $region46: #{reverse.0} parent=38 // pred_region
        %s181 = ssub.s32 256, 1
        loop: start=0, step=1, limit=1
        $region48: #{reverse.0} parent=46 // loop_pre_header
          _
        $region49: #{reverse.0} parent=46 // loop_header
          %s183 = sphi 0, %s187
          %p184 = scmp.ge.s32.totalorder %s183, 1
          %s188 = sphi [#allocation1], [#allocation1]
          %s189 = sphi %s1, %s1
        $region50: #{reverse.0} parent=46 // loop_header_branch
          %186 = sbr.rel (%p184) target = $region54
        $region51: #{reverse.0} parent=46 // loop_body
          %v190 = vld [vmem:[%s188] sm:%s181]
          %191 = vst [vmem:[%s189] sm:%s181] %v190
          %v192 = vld [vmem:[%s188 + $0x8] sm:%s181]
          %193 = vst [vmem:[%s189 + $0x8] sm:%s181] %v192
          %v194 = vld [vmem:[%s188 + $0x10] sm:%s181]
          %195 = vst [vmem:[%s189 + $0x10] sm:%s181] %v194
          %v196 = vld [vmem:[%s188 + $0x18] sm:%s181]
          %197 = vst [vmem:[%s189 + $0x18] sm:%s181] %v196
          %v198 = vld [vmem:[%s188 + $0x20] sm:%s181]
          %199 = vst [vmem:[%s189 + $0x20] sm:%s181] %v198
          %v200 = vld [vmem:[%s188 + $0x28] sm:%s181]
          %201 = vst [vmem:[%s189 + $0x28] sm:%s181] %v200
          %v202 = vld [vmem:[%s188 + $0x30] sm:%s181]
          %203 = vst [vmem:[%s189 + $0x30] sm:%s181] %v202
          %v204 = vld [vmem:[%s188 + $0x38] sm:%s181]
          %205 = vst [vmem:[%s189 + $0x38] sm:%s181] %v204
        $region52: #{reverse.0} parent=46 // loop_footer
          %s187 = sadd.s32 1, %s183
        $region53: #{reverse.0} parent=46 // loop_footer_branch
          %182 = sbr.rel target = $region49
        $region54: #{reverse.0} parent=46 // loop_exit
          _
      $region47: #{reverse.0} parent=38 // pred_fallthru
        _
    $region39: #{reverse.0} parent=1 // pred_fallthru
      _
    %234 = vnop

// kernel: fourier_unit_forward.1
$region0: #{fourier_unit_forward.1}
  #allocation0 [shape = 'u32[]', space=smem, size = 0x4, offset = 0x4, fixed_abs, tag = 'smem constant byte address 0x4 - core index']
  #allocation1 [shape = 'u32[144,128]{1,0:T(1,128)}', space=vmem, size = 0x12000, scoped, tag = 'internal scratch']
  %s0 = inlined_call_operand.vmem [shape: f32[2,4,144], index: 0, kind: input, shape index: {}]
  %s1 = inlined_call_operand.vmem [shape: f32[2,4,144], index: 1, kind: input, shape index: {}]
  %s2 = inlined_call_operand.vmem [shape: f32[8,4], index: 2, kind: input, shape index: {}]
  %s3 = inlined_call_operand.vmem [shape: f32[8,4], index: 3, kind: input, shape index: {}]
  %s4 = inlined_call_operand.vmem [shape: f32[8,1], index: 4, kind: input, shape index: {}]
  %s5 = inlined_call_operand.vmem [shape: f32[8,1], index: 5, kind: input, shape index: {}]
  %s6 = inlined_call_operand.vmem [shape: f32[2,8,144], index: 6, kind: output, shape index: {}]
  %s7 = sld [smem:[#allocation0]]
  $region34: #{fourier_unit_forward.1} parent=0
    _
  %s9 = ssub.s32 1, %s7
  %s10 = scalar_select 0, %s9, %s7
  // Predicated region
  $region2: #{fourier_unit_forward.1} parent=0 // pred_check
    _
  $region3: #{fourier_unit_forward.1} parent=0 // pred_check_branch
    %12 = sbr.rel (0) target = $region5
  $region4: #{fourier_unit_forward.1} parent=0 // pred_region
    _
  $region5: #{fourier_unit_forward.1} parent=0 // pred_fallthru
    _
  // Predicated region
  $region6: #{fourier_unit_forward.1} parent=0 // pred_check
    _
  $region7: #{fourier_unit_forward.1} parent=0 // pred_check_branch
    %14 = sbr.rel (0) target = $region9
  $region8: #{fourier_unit_forward.1} parent=0 // pred_region
    _
  $region9: #{fourier_unit_forward.1} parent=0 // pred_fallthru
    _
  // Predicated region
  $region10: #{fourier_unit_forward.1} parent=0 // pred_check
    _
  $region11: #{fourier_unit_forward.1} parent=0 // pred_check_branch
    %16 = sbr.rel (0) target = $region13
  $region12: #{fourier_unit_forward.1} parent=0 // pred_region
    _
  $region13: #{fourier_unit_forward.1} parent=0 // pred_fallthru
    _
  // Predicated region
  $region14: #{fourier_unit_forward.1} parent=0 // pred_check
    _
  $region15: #{fourier_unit_forward.1} parent=0 // pred_check_branch
    %18 = sbr.rel (0) target = $region17
  $region16: #{fourier_unit_forward.1} parent=0 // pred_region
    _
  $region17: #{fourier_unit_forward.1} parent=0 // pred_fallthru
    _
  // Predicated region
  $region18: #{fourier_unit_forward.1} parent=0 // pred_check
    _
  $region19: #{fourier_unit_forward.1} parent=0 // pred_check_branch
    %20 = sbr.rel (0) target = $region21
  $region20: #{fourier_unit_forward.1} parent=0 // pred_region
    _
  $region21: #{fourier_unit_forward.1} parent=0 // pred_fallthru
    _
  // Predicated region
  $region22: #{fourier_unit_forward.1} parent=0 // pred_check
    _
  $region23: #{fourier_unit_forward.1} parent=0 // pred_check_branch
    %22 = sbr.rel (0) target = $region25
  $region24: #{fourier_unit_forward.1} parent=0 // pred_region
    _
  $region25: #{fourier_unit_forward.1} parent=0 // pred_fallthru
    _
  %v23 = vld [vmem:[%s0] sm:$0xff]
  %v24 = vld [vmem:[%s1] sm:$0xff]
  %s25 = scalar_lea.vmem %s0, 8
  %v26 = vld [vmem:[%s25] sm:$0xff]
  %s27 = scalar_lea.vmem %s1, 8
  %v28 = vld [vmem:[%s27] sm:$0xff]
  %v30 = vcombine.high %v26, %v26
  %vm31 = vcmask 130048
  %v32 = vsel %vm31, %v30, 0
  %34 = vmatprep.subr.mxu0 0.0
  %35 = vmatpush1.xpose.msra.mxu0 0.0
  %36 = vmatprep.subr.mxu0 0.0
  %37 = vmatpush1.xpose.msra.mxu0 0.0
  %38 = vmatprep.subr.mxu0 0.0
  %39 = vmatpush1.xpose.msra.mxu0 0.0
  %40 = vmatprep.subr.mxu0 0.0
  %41 = vmatpush1.xpose.msra.mxu0 0.0
  %42 = vmatprep.subr.mxu0 0.0
  %43 = vmatpush1.xpose.msra.mxu0 0.0
  %44 = vmatprep.subr.mxu0 0.0
  %45 = vmatpush1.xpose.msra.mxu0 0.0
  %46 = vmatprep.subr.mxu0 0.0
  %47 = vmatpush1.xpose.msra.mxu0 0.0
  %48 = vmatprep.subr.mxu0 0.0
  %49 = vmatpush1.xpose.msra.mxu0 0.0
  %50 = vmatprep.subr.mxu0 0.0
  %51 = vmatpush1.xpose.msra.mxu0 0.0
  %52 = vmatprep.subr.mxu0 0.0
  %53 = vmatpush1.xpose.msra.mxu0 0.0
  %54 = vmatprep.subr.mxu0 0.0
  %55 = vmatpush1.xpose.msra.mxu0 0.0
  %56 = vmatprep.subr.mxu0 0.0
  %57 = vmatpush1.xpose.msra.mxu0 0.0
  %58 = vmatprep.subr.mxu0 0.0
  %59 = vmatpush1.xpose.msra.mxu0 0.0
  %60 = vmatprep.subr.mxu0 0.0
  %61 = vmatpush1.xpose.msra.mxu0 0.0
  %62 = vmatprep.subr.mxu0 0.0
  %63 = vmatpush1.xpose.msra.mxu0 0.0
  %64 = vmatprep.subr.mxu0 %v32
  %65 = vmatpush1.xpose.msra.mxu0 %v26
  %66 = vmatprep.subr.mxu0 0.0
  %67 = vmatpush2.xpose.msra.mxu0 0.0
  %68 = vmatprep.subr.mxu0 0.0
  %69 = vmatpush2.xpose.msra.mxu0 0.0
  %70 = vmatprep.subr.mxu0 0.0
  %71 = vmatpush2.xpose.msra.mxu0 0.0
  %72 = vmatprep.subr.mxu0 0.0
  %73 = vmatpush2.xpose.msra.mxu0 0.0
  %74 = vmatprep.subr.mxu0 0.0
  %75 = vmatpush2.xpose.msra.mxu0 0.0
  %76 = vmatprep.subr.mxu0 0.0
  %77 = vmatpush2.xpose.msra.mxu0 0.0
  %78 = vmatprep.subr.mxu0 0.0
  %79 = vmatpush2.xpose.msra.mxu0 0.0
  %80 = vmatprep.subr.mxu0 0.0
  %81 = vmatpush2.xpose.msra.mxu0 0.0
  %82 = vmatprep.subr.mxu0 0.0
  %83 = vmatpush2.xpose.msra.mxu0 0.0
  %84 = vmatprep.subr.mxu0 0.0
  %85 = vmatpush2.xpose.msra.mxu0 0.0
  %86 = vmatprep.subr.mxu0 0.0
  %87 = vmatpush2.xpose.msra.mxu0 0.0
  %88 = vmatprep.subr.mxu0 0.0
  %89 = vmatpush2.xpose.msra.mxu0 0.0
  %90 = vmatprep.subr.mxu0 0.0
  %91 = vmatpush2.xpose.msra.mxu0 0.0
  %92 = vmatprep.subr.mxu0 0.0
  %93 = vmatpush2.xpose.msra.mxu0 0.0
  %94 = vmatprep.subr.mxu0 0.0
  %95 = vmatpush2.xpose.msra.mxu0 0.0
  %96 = vmatprep.subr.mxu0 0.0
  %97 = vmatpush2.xpose.msra.mxu0 0.0
  %98 = vmatprep.mubr.f32.mxu0 %v32
  %99 = vmatmul.mubr.f32.gmra.mxu0 %v26
  %v100 = vpop.f32.mrf.mxu0
  %v101 = vadd.f32 0.0, %v100
  %v102 = vpop.f32.mrf.mxu0
  %103 = vdwg.mxu0
  %v105 = vcombine.high %v23, %v23
  %v106 = vsel %vm31, %v105, 0
  %108 = vmatprep.subr.mxu0 0.0
  %109 = vmatpush1.xpose.msra.mxu0 0.0
  %110 = vmatprep.subr.mxu0 0.0
  %111 = vmatpush1.xpose.msra.mxu0 0.0
  %112 = vmatprep.subr.mxu0 0.0
  %113 = vmatpush1.xpose.msra.mxu0 0.0
  %114 = vmatprep.subr.mxu0 0.0
  %115 = vmatpush1.xpose.msra.mxu0 0.0
  %116 = vmatprep.subr.mxu0 0.0
  %117 = vmatpush1.xpose.msra.mxu0 0.0
  %118 = vmatprep.subr.mxu0 0.0
  %119 = vmatpush1.xpose.msra.mxu0 0.0
  %120 = vmatprep.subr.mxu0 0.0
  %121 = vmatpush1.xpose.msra.mxu0 0.0
  %122 = vmatprep.subr.mxu0 0.0
  %123 = vmatpush1.xpose.msra.mxu0 0.0
  %124 = vmatprep.subr.mxu0 0.0
  %125 = vmatpush1.xpose.msra.mxu0 0.0
  %126 = vmatprep.subr.mxu0 0.0
  %127 = vmatpush1.xpose.msra.mxu0 0.0
  %128 = vmatprep.subr.mxu0 0.0
  %129 = vmatpush1.xpose.msra.mxu0 0.0
  %130 = vmatprep.subr.mxu0 0.0
  %131 = vmatpush1.xpose.msra.mxu0 0.0
  %132 = vmatprep.subr.mxu0 0.0
  %133 = vmatpush1.xpose.msra.mxu0 0.0
  %134 = vmatprep.subr.mxu0 0.0
  %135 = vmatpush1.xpose.msra.mxu0 0.0
  %136 = vmatprep.subr.mxu0 0.0
  %137 = vmatpush1.xpose.msra.mxu0 0.0
  %138 = vmatprep.subr.mxu0 %v106
  %139 = vmatpush1.xpose.msra.mxu0 %v23
  %140 = vmatprep.subr.mxu0 0.0
  %141 = vmatpush2.xpose.msra.mxu0 0.0
  %142 = vmatprep.subr.mxu0 0.0
  %143 = vmatpush2.xpose.msra.mxu0 0.0
  %144 = vmatprep.subr.mxu0 0.0
  %145 = vmatpush2.xpose.msra.mxu0 0.0
  %146 = vmatprep.subr.mxu0 0.0
  %147 = vmatpush2.xpose.msra.mxu0 0.0
  %148 = vmatprep.subr.mxu0 0.0
  %149 = vmatpush2.xpose.msra.mxu0 0.0
  %150 = vmatprep.subr.mxu0 0.0
  %151 = vmatpush2.xpose.msra.mxu0 0.0
  %152 = vmatprep.subr.mxu0 0.0
  %153 = vmatpush2.xpose.msra.mxu0 0.0
  %154 = vmatprep.subr.mxu0 0.0
  %155 = vmatpush2.xpose.msra.mxu0 0.0
  %156 = vmatprep.subr.mxu0 0.0
  %157 = vmatpush2.xpose.msra.mxu0 0.0
  %158 = vmatprep.subr.mxu0 0.0
  %159 = vmatpush2.xpose.msra.mxu0 0.0
  %160 = vmatprep.subr.mxu0 0.0
  %161 = vmatpush2.xpose.msra.mxu0 0.0
  %162 = vmatprep.subr.mxu0 0.0
  %163 = vmatpush2.xpose.msra.mxu0 0.0
  %164 = vmatprep.subr.mxu0 0.0
  %165 = vmatpush2.xpose.msra.mxu0 0.0
  %166 = vmatprep.subr.mxu0 0.0
  %167 = vmatpush2.xpose.msra.mxu0 0.0
  %168 = vmatprep.subr.mxu0 0.0
  %169 = vmatpush2.xpose.msra.mxu0 0.0
  %170 = vmatprep.subr.mxu0 0.0
  %171 = vmatpush2.xpose.msra.mxu0 0.0
  %172 = vmatprep.mubr.f32.mxu0 %v106
  %173 = vmatmul.mubr.f32.gmra.mxu0 %v23
  %v174 = vpop.f32.mrf.mxu0
  %v175 = vadd.f32 %v101, %v174
  %v176 = vpop.f32.mrf.mxu0
  %177 = vdwg.mxu0
  %v179 = vcombine.high %v28, %v28
  %v180 = vsel %vm31, %v179, 0
  %182 = vmatprep.subr.mxu0 0.0
  %183 = vmatpush1.xpose.msra.mxu0 0.0
  %184 = vmatprep.subr.mxu0 0.0
  %185 = vmatpush1.xpose.msra.mxu0 0.0
  %186 = vmatprep.subr.mxu0 0.0
  %187 = vmatpush1.xpose.msra.mxu0 0.0
  %188 = vmatprep.subr.mxu0 0.0
  %189 = vmatpush1.xpose.msra.mxu0 0.0
  %190 = vmatprep.subr.mxu0 0.0
  %191 = vmatpush1.xpose.msra.mxu0 0.0
  %192 = vmatprep.subr.mxu0 0.0
  %193 = vmatpush1.xpose.msra.mxu0 0.0
  %194 = vmatprep.subr.mxu0 0.0
  %195 = vmatpush1.xpose.msra.mxu0 0.0
  %196 = vmatprep.subr.mxu0 0.0
  %197 = vmatpush1.xpose.msra.mxu0 0.0
  %198 = vmatprep.subr.mxu0 0.0
  %199 = vmatpush1.xpose.msra.mxu0 0.0
  %200 = vmatprep.subr.mxu0 0.0
  %201 = vmatpush1.xpose.msra.mxu0 0.0
  %202 = vmatprep.subr.mxu0 0.0
  %203 = vmatpush1.xpose.msra.mxu0 0.0
  %204 = vmatprep.subr.mxu0 0.0
  %205 = vmatpush1.xpose.msra.mxu0 0.0
  %206 = vmatprep.subr.mxu0 0.0
  %207 = vmatpush1.xpose.msra.mxu0 0.0
  %208 = vmatprep.subr.mxu0 0.0
  %209 = vmatpush1.xpose.msra.mxu0 0.0
  %210 = vmatprep.subr.mxu0 0.0
  %211 = vmatpush1.xpose.msra.mxu0 0.0
  %212 = vmatprep.subr.mxu0 %v180
  %213 = vmatpush1.xpose.msra.mxu0 %v28
  %214 = vmatprep.subr.mxu0 0.0
  %215 = vmatpush2.xpose.msra.mxu0 0.0
  %216 = vmatprep.subr.mxu0 0.0
  %217 = vmatpush2.xpose.msra.mxu0 0.0
  %218 = vmatprep.subr.mxu0 0.0
  %219 = vmatpush2.xpose.msra.mxu0 0.0
  %220 = vmatprep.subr.mxu0 0.0
  %221 = vmatpush2.xpose.msra.mxu0 0.0
  %222 = vmatprep.subr.mxu0 0.0
  %223 = vmatpush2.xpose.msra.mxu0 0.0
  %224 = vmatprep.subr.mxu0 0.0
  %225 = vmatpush2.xpose.msra.mxu0 0.0
  %226 = vmatprep.subr.mxu0 0.0
  %227 = vmatpush2.xpose.msra.mxu0 0.0
  %228 = vmatprep.subr.mxu0 0.0
  %229 = vmatpush2.xpose.msra.mxu0 0.0
  %230 = vmatprep.subr.mxu0 0.0
  %231 = vmatpush2.xpose.msra.mxu0 0.0
  %232 = vmatprep.subr.mxu0 0.0
  %233 = vmatpush2.xpose.msra.mxu0 0.0
  %234 = vmatprep.subr.mxu0 0.0
  %235 = vmatpush2.xpose.msra.mxu0 0.0
  %236 = vmatprep.subr.mxu0 0.0
  %237 = vmatpush2.xpose.msra.mxu0 0.0
  %238 = vmatprep.subr.mxu0 0.0
  %239 = vmatpush2.xpose.msra.mxu0 0.0
  %240 = vmatprep.subr.mxu0 0.0
  %241 = vmatpush2.xpose.msra.mxu0 0.0
  %242 = vmatprep.subr.mxu0 0.0
  %243 = vmatpush2.xpose.msra.mxu0 0.0
  %244 = vmatprep.subr.mxu0 0.0
  %245 = vmatpush2.xpose.msra.mxu0 0.0
  %246 = vmatprep.mubr.f32.mxu0 %v32
  %247 = vmatmul.mubr.f32.gmra.mxu0 %v26
  %v248 = vpop.f32.mrf.mxu0
  %v249 = vadd.f32 0.0, %v248
  %v250 = vpop.f32.mrf.mxu0
  %251 = vdwg.mxu0
  %v253 = vcombine.high %v24, %v24
  %v254 = vsel %vm31, %v253, 0
  %256 = vmatprep.subr.mxu0 0.0
  %257 = vmatpush1.xpose.msra.mxu0 0.0
  %258 = vmatprep.subr.mxu0 0.0
  %259 = vmatpush1.xpose.msra.mxu0 0.0
  %260 = vmatprep.subr.mxu0 0.0
  %261 = vmatpush1.xpose.msra.mxu0 0.0
  %262 = vmatprep.subr.mxu0 0.0
  %263 = vmatpush1.xpose.msra.mxu0 0.0
  %264 = vmatprep.subr.mxu0 0.0
  %265 = vmatpush1.xpose.msra.mxu0 0.0
  %266 = vmatprep.subr.mxu0 0.0
  %267 = vmatpush1.xpose.msra.mxu0 0.0
  %268 = vmatprep.subr.mxu0 0.0
  %269 = vmatpush1.xpose.msra.mxu0 0.0
  %270 = vmatprep.subr.mxu0 0.0
  %271 = vmatpush1.xpose.msra.mxu0 0.0
  %272 = vmatprep.subr.mxu0 0.0
  %273 = vmatpush1.xpose.msra.mxu0 0.0
  %274 = vmatprep.subr.mxu0 0.0
  %275 = vmatpush1.xpose.msra.mxu0 0.0
  %276 = vmatprep.subr.mxu0 0.0
  %277 = vmatpush1.xpose.msra.mxu0 0.0
  %278 = vmatprep.subr.mxu0 0.0
  %279 = vmatpush1.xpose.msra.mxu0 0.0
  %280 = vmatprep.subr.mxu0 0.0
  %281 = vmatpush1.xpose.msra.mxu0 0.0
  %282 = vmatprep.subr.mxu0 0.0
  %283 = vmatpush1.xpose.msra.mxu0 0.0
  %284 = vmatprep.subr.mxu0 0.0
  %285 = vmatpush1.xpose.msra.mxu0 0.0
  %286 = vmatprep.subr.mxu0 %v254
  %287 = vmatpush1.xpose.msra.mxu0 %v24
  %288 = vmatprep.subr.mxu0 0.0
  %289 = vmatpush2.xpose.msra.mxu0 0.0
  %290 = vmatprep.subr.mxu0 0.0
  %291 = vmatpush2.xpose.msra.mxu0 0.0
  %292 = vmatprep.subr.mxu0 0.0
  %293 = vmatpush2.xpose.msra.mxu0 0.0
  %294 = vmatprep.subr.mxu0 0.0
  %295 = vmatpush2.xpose.msra.mxu0 0.0
  %296 = vmatprep.subr.mxu0 0.0
  %297 = vmatpush2.xpose.msra.mxu0 0.0
  %298 = vmatprep.subr.mxu0 0.0
  %299 = vmatpush2.xpose.msra.mxu0 0.0
  %300 = vmatprep.subr.mxu0 0.0
  %301 = vmatpush2.xpose.msra.mxu0 0.0
  %302 = vmatprep.subr.mxu0 0.0
  %303 = vmatpush2.xpose.msra.mxu0 0.0
  %304 = vmatprep.subr.mxu0 0.0
  %305 = vmatpush2.xpose.msra.mxu0 0.0
  %306 = vmatprep.subr.mxu0 0.0
  %307 = vmatpush2.xpose.msra.mxu0 0.0
  %308 = vmatprep.subr.mxu0 0.0
  %309 = vmatpush2.xpose.msra.mxu0 0.0
  %310 = vmatprep.subr.mxu0 0.0
  %311 = vmatpush2.xpose.msra.mxu0 0.0
  %312 = vmatprep.subr.mxu0 0.0
  %313 = vmatpush2.xpose.msra.mxu0 0.0
  %314 = vmatprep.subr.mxu0 0.0
  %315 = vmatpush2.xpose.msra.mxu0 0.0
  %316 = vmatprep.subr.mxu0 0.0
  %317 = vmatpush2.xpose.msra.mxu0 0.0
  %318 = vmatprep.subr.mxu0 0.0
  %319 = vmatpush2.xpose.msra.mxu0 0.0
  %320 = vmatprep.mubr.f32.mxu0 %v106
  %321 = vmatmul.mubr.f32.gmra.mxu0 %v23
  %v322 = vpop.f32.mrf.mxu0
  %v323 = vadd.f32 %v249, %v322
  %v324 = vpop.f32.mrf.mxu0
  %325 = vdwg.mxu0
  %326 = vmatprep.subr.mxu0 0.0
  %327 = vmatpush1.xpose.msra.mxu0 0.0
  %328 = vmatprep.subr.mxu0 0.0
  %329 = vmatpush1.xpose.msra.mxu0 0.0
  %330 = vmatprep.subr.mxu0 0.0
  %331 = vmatpush1.xpose.msra.mxu0 0.0
  %332 = vmatprep.subr.mxu0 0.0
  %333 = vmatpush1.xpose.msra.mxu0 0.0
  %334 = vmatprep.subr.mxu0 0.0
  %335 = vmatpush1.xpose.msra.mxu0 0.0
  %336 = vmatprep.subr.mxu0 0.0
  %337 = vmatpush1.xpose.msra.mxu0 0.0
  %338 = vmatprep.subr.mxu0 0.0
  %339 = vmatpush1.xpose.msra.mxu0 0.0
  %340 = vmatprep.subr.mxu0 0.0
  %341 = vmatpush1.xpose.msra.mxu0 0.0
  %342 = vmatprep.subr.mxu0 0.0
  %343 = vmatpush1.xpose.msra.mxu0 0.0
  %344 = vmatprep.subr.mxu0 0.0
  %345 = vmatpush1.xpose.msra.mxu0 0.0
  %346 = vmatprep.subr.mxu0 0.0
  %347 = vmatpush1.xpose.msra.mxu0 0.0
  %348 = vmatprep.subr.mxu0 0.0
  %349 = vmatpush1.xpose.msra.mxu0 0.0
  %350 = vmatprep.subr.mxu0 0.0
  %351 = vmatpush1.xpose.msra.mxu0 0.0
  %352 = vmatprep.subr.mxu0 0.0
  %353 = vmatpush1.xpose.msra.mxu0 0.0
  %354 = vmatprep.subr.mxu0 0.0
  %355 = vmatpush1.xpose.msra.mxu0 0.0
  %356 = vmatprep.subr.mxu0 %v180
  %357 = vmatpush1.xpose.msra.mxu0 %v28
  %358 = vmatprep.subr.mxu0 0.0
  %359 = vmatpush2.xpose.msra.mxu0 0.0
  %360 = vmatprep.subr.mxu0 0.0
  %361 = vmatpush2.xpose.msra.mxu0 0.0
  %362 = vmatprep.subr.mxu0 0.0
  %363 = vmatpush2.xpose.msra.mxu0 0.0
  %364 = vmatprep.subr.mxu0 0.0
  %365 = vmatpush2.xpose.msra.mxu0 0.0
  %366 = vmatprep.subr.mxu0 0.0
  %367 = vmatpush2.xpose.msra.mxu0 0.0
  %368 = vmatprep.subr.mxu0 0.0
  %369 = vmatpush2.xpose.msra.mxu0 0.0
  %370 = vmatprep.subr.mxu0 0.0
  %371 = vmatpush2.xpose.msra.mxu0 0.0
  %372 = vmatprep.subr.mxu0 0.0
  %373 = vmatpush2.xpose.msra.mxu0 0.0
  %374 = vmatprep.subr.mxu0 0.0
  %375 = vmatpush2.xpose.msra.mxu0 0.0
  %376 = vmatprep.subr.mxu0 0.0
  %377 = vmatpush2.xpose.msra.mxu0 0.0
  %378 = vmatprep.subr.mxu0 0.0
  %379 = vmatpush2.xpose.msra.mxu0 0.0
  %380 = vmatprep.subr.mxu0 0.0
  %381 = vmatpush2.xpose.msra.mxu0 0.0
  %382 = vmatprep.subr.mxu0 0.0
  %383 = vmatpush2.xpose.msra.mxu0 0.0
  %384 = vmatprep.subr.mxu0 0.0
  %385 = vmatpush2.xpose.msra.mxu0 0.0
  %386 = vmatprep.subr.mxu0 0.0
  %387 = vmatpush2.xpose.msra.mxu0 0.0
  %388 = vmatprep.subr.mxu0 0.0
  %389 = vmatpush2.xpose.msra.mxu0 0.0
  %390 = vmatprep.mubr.f32.mxu0 %v180
  %391 = vmatmul.mubr.f32.gmra.mxu0 %v28
  %v392 = vpop.f32.mrf.mxu0
  %v393 = vadd.f32 0.0, %v392
  %v394 = vpop.f32.mrf.mxu0
  %395 = vdwg.mxu0
  %396 = vmatprep.subr.mxu0 0.0
  %397 = vmatpush1.xpose.msra.mxu0 0.0
  %398 = vmatprep.subr.mxu0 0.0
  %399 = vmatpush1.xpose.msra.mxu0 0.0
  %400 = vmatprep.subr.mxu0 0.0
  %401 = vmatpush1.xpose.msra.mxu0 0.0
  %402 = vmatprep.subr.mxu0 0.0
  %403 = vmatpush1.xpose.msra.mxu0 0.0
  %404 = vmatprep.subr.mxu0 0.0
  %405 = vmatpush1.xpose.msra.mxu0 0.0
  %406 = vmatprep.subr.mxu0 0.0
  %407 = vmatpush1.xpose.msra.mxu0 0.0
  %408 = vmatprep.subr.mxu0 0.0
  %409 = vmatpush1.xpose.msra.mxu0 0.0
  %410 = vmatprep.subr.mxu0 0.0
  %411 = vmatpush1.xpose.msra.mxu0 0.0
  %412 = vmatprep.subr.mxu0 0.0
  %413 = vmatpush1.xpose.msra.mxu0 0.0
  %414 = vmatprep.subr.mxu0 0.0
  %415 = vmatpush1.xpose.msra.mxu0 0.0
  %416 = vmatprep.subr.mxu0 0.0
  %417 = vmatpush1.xpose.msra.mxu0 0.0
  %418 = vmatprep.subr.mxu0 0.0
  %419 = vmatpush1.xpose.msra.mxu0 0.0
  %420 = vmatprep.subr.mxu0 0.0
  %421 = vmatpush1.xpose.msra.mxu0 0.0
  %422 = vmatprep.subr.mxu0 0.0
  %423 = vmatpush1.xpose.msra.mxu0 0.0
  %424 = vmatprep.subr.mxu0 0.0
  %425 = vmatpush1.xpose.msra.mxu0 0.0
  %426 = vmatprep.subr.mxu0 %v254
  %427 = vmatpush1.xpose.msra.mxu0 %v24
  %428 = vmatprep.subr.mxu0 0.0
  %429 = vmatpush2.xpose.msra.mxu0 0.0
  %430 = vmatprep.subr.mxu0 0.0
  %431 = vmatpush2.xpose.msra.mxu0 0.0
  %432 = vmatprep.subr.mxu0 0.0
  %433 = vmatpush2.xpose.msra.mxu0 0.0
  %434 = vmatprep.subr.mxu0 0.0
  %435 = vmatpush2.xpose.msra.mxu0 0.0
  %436 = vmatprep.subr.mxu0 0.0
  %437 = vmatpush2.xpose.msra.mxu0 0.0
  %438 = vmatprep.subr.mxu0 0.0
  %439 = vmatpush2.xpose.msra.mxu0 0.0
  %440 = vmatprep.subr.mxu0 0.0
  %441 = vmatpush2.xpose.msra.mxu0 0.0
  %442 = vmatprep.subr.mxu0 0.0
  %443 = vmatpush2.xpose.msra.mxu0 0.0
  %444 = vmatprep.subr.mxu0 0.0
  %445 = vmatpush2.xpose.msra.mxu0 0.0
  %446 = vmatprep.subr.mxu0 0.0
  %447 = vmatpush2.xpose.msra.mxu0 0.0
  %448 = vmatprep.subr.mxu0 0.0
  %449 = vmatpush2.xpose.msra.mxu0 0.0
  %450 = vmatprep.subr.mxu0 0.0
  %451 = vmatpush2.xpose.msra.mxu0 0.0
  %452 = vmatprep.subr.mxu0 0.0
  %453 = vmatpush2.xpose.msra.mxu0 0.0
  %454 = vmatprep.subr.mxu0 0.0
  %455 = vmatpush2.xpose.msra.mxu0 0.0
  %456 = vmatprep.subr.mxu0 0.0
  %457 = vmatpush2.xpose.msra.mxu0 0.0
  %458 = vmatprep.subr.mxu0 0.0
  %459 = vmatpush2.xpose.msra.mxu0 0.0
  %460 = vmatprep.mubr.f32.mxu0 %v254
  %461 = vmatmul.mubr.f32.gmra.mxu0 %v24
  %v462 = vpop.f32.mrf.mxu0
  %v463 = vadd.f32 %v393, %v462
  %v464 = vpop.f32.mrf.mxu0
  %465 = vdwg.mxu0
  %466 = vmatprep.subr.mxu0 0.0
  %467 = vmatpush1.msra.mxu0 1.0
  %468 = vmatprep.subr.mxu0 0.0
  %469 = vmatpush1.msra.mxu0 1.0
  %470 = vmatprep.subr.mxu0 0.0
  %471 = vmatpush1.msra.mxu0 1.0
  %472 = vmatprep.subr.mxu0 0.0
  %473 = vmatpush1.msra.mxu0 1.0
  %474 = vmatprep.subr.mxu0 0.0
  %475 = vmatpush1.msra.mxu0 1.0
  %476 = vmatprep.subr.mxu0 0.0
  %477 = vmatpush1.msra.mxu0 1.0
  %478 = vmatprep.subr.mxu0 0.0
  %479 = vmatpush1.msra.mxu0 1.0
  %480 = vmatprep.subr.mxu0 0.0
  %481 = vmatpush1.msra.mxu0 1.0
  %482 = vmatprep.subr.mxu0 0.0
  %483 = vmatpush1.msra.mxu0 1.0
  %484 = vmatprep.subr.mxu0 0.0
  %485 = vmatpush1.msra.mxu0 1.0
  %486 = vmatprep.subr.mxu0 0.0
  %487 = vmatpush1.msra.mxu0 1.0
  %488 = vmatprep.subr.mxu0 0.0
  %489 = vmatpush1.msra.mxu0 1.0
  %490 = vmatprep.subr.mxu0 0.0
  %491 = vmatpush1.msra.mxu0 1.0
  %492 = vmatprep.subr.mxu0 0.0
  %493 = vmatpush1.msra.mxu0 1.0
  %494 = vmatprep.subr.mxu0 0.0
  %495 = vmatpush1.msra.mxu0 1.0
  %496 = vmatprep.subr.mxu0 0.0
  %497 = vmatpush1.msra.mxu0 1.0
  %498 = vmatprep.subr.mxu0 0.0
  %499 = vmatpush2.msra.mxu0 0.0
  %500 = vmatprep.subr.mxu0 0.0
  %501 = vmatpush2.msra.mxu0 0.0
  %502 = vmatprep.subr.mxu0 0.0
  %503 = vmatpush2.msra.mxu0 0.0
  %504 = vmatprep.subr.mxu0 0.0
  %505 = vmatpush2.msra.mxu0 0.0
  %506 = vmatprep.subr.mxu0 0.0
  %507 = vmatpush2.msra.mxu0 0.0
  %508 = vmatprep.subr.mxu0 0.0
  %509 = vmatpush2.msra.mxu0 0.0
  %510 = vmatprep.subr.mxu0 0.0
  %511 = vmatpush2.msra.mxu0 0.0
  %512 = vmatprep.subr.mxu0 0.0
  %513 = vmatpush2.msra.mxu0 0.0
  %514 = vmatprep.subr.mxu0 0.0
  %515 = vmatpush2.msra.mxu0 0.0
  %516 = vmatprep.subr.mxu0 0.0
  %517 = vmatpush2.msra.mxu0 0.0
  %518 = vmatprep.subr.mxu0 0.0
  %519 = vmatpush2.msra.mxu0 0.0
  %520 = vmatprep.subr.mxu0 0.0
  %521 = vmatpush2.msra.mxu0 0.0
  %522 = vmatprep.subr.mxu0 0.0
  %523 = vmatpush2.msra.mxu0 0.0
  %524 = vmatprep.subr.mxu0 0.0
  %525 = vmatpush2.msra.mxu0 0.0
  %526 = vmatprep.subr.mxu0 0.0
  %527 = vmatpush2.msra.mxu0 1.0
  %528 = vmatprep.subr.mxu0 0.0
  %529 = vmatpush2.msra.mxu0 1.0
  %530 = vmatprep.mubr.f32.mxu0 %v32
  %531 = vmatmul.mubr.f32.gmra.mxu0 %v26
  %v532 = vpop.f32.mrf.mxu0
  %v533 = vadd.f32 0.0, %v532
  %v534 = vpop.f32.mrf.mxu0
  %535 = vdwg.mxu0
  %536 = vmatprep.subr.mxu0 0.0
  %537 = vmatpush1.msra.mxu0 1.0
  %538 = vmatprep.subr.mxu0 0.0
  %539 = vmatpush1.msra.mxu0 1.0
  %540 = vmatprep.subr.mxu0 0.0
  %541 = vmatpush1.msra.mxu0 1.0
  %542 = vmatprep.subr.mxu0 0.0
  %543 = vmatpush1.msra.mxu0 1.0
  %544 = vmatprep.subr.mxu0 0.0
  %545 = vmatpush1.msra.mxu0 1.0
  %546 = vmatprep.subr.mxu0 0.0
  %547 = vmatpush1.msra.mxu0 1.0
  %548 = vmatprep.subr.mxu0 0.0
  %549 = vmatpush1.msra.mxu0 1.0
  %550 = vmatprep.subr.mxu0 0.0
  %551 = vmatpush1.msra.mxu0 1.0
  %552 = vmatprep.subr.mxu0 0.0
  %553 = vmatpush1.msra.mxu0 1.0
  %554 = vmatprep.subr.mxu0 0.0
  %555 = vmatpush1.msra.mxu0 1.0
  %556 = vmatprep.subr.mxu0 0.0
  %557 = vmatpush1.msra.mxu0 1.0
  %558 = vmatprep.subr.mxu0 0.0
  %559 = vmatpush1.msra.mxu0 1.0
  %560 = vmatprep.subr.mxu0 0.0
  %561 = vmatpush1.msra.mxu0 1.0
  %562 = vmatprep.subr.mxu0 0.0
  %563 = vmatpush1.msra.mxu0 1.0
  %564 = vmatprep.subr.mxu0 0.0
  %565 = vmatpush1.msra.mxu0 1.0
  %566 = vmatprep.subr.mxu0 0.0
  %567 = vmatpush1.msra.mxu0 1.0
  %568 = vmatprep.subr.mxu0 0.0
  %569 = vmatpush2.msra.mxu0 0.0
  %570 = vmatprep.subr.mxu0 0.0
  %571 = vmatpush2.msra.mxu0 0.0
  %572 = vmatprep.subr.mxu0 0.0
  %573 = vmatpush2.msra.mxu0 0.0
  %574 = vmatprep.subr.mxu0 0.0
  %575 = vmatpush2.msra.mxu0 0.0
  %576 = vmatprep.subr.mxu0 0.0
  %577 = vmatpush2.msra.mxu0 0.0
  %578 = vmatprep.subr.mxu0 0.0
  %579 = vmatpush2.msra.mxu0 0.0
  %580 = vmatprep.subr.mxu0 0.0
  %581 = vmatpush2.msra.mxu0 0.0
  %582 = vmatprep.subr.mxu0 0.0
  %583 = vmatpush2.msra.mxu0 0.0
  %584 = vmatprep.subr.mxu0 0.0
  %585 = vmatpush2.msra.mxu0 0.0
  %586 = vmatprep.subr.mxu0 0.0
  %587 = vmatpush2.msra.mxu0 0.0
  %588 = vmatprep.subr.mxu0 0.0
  %589 = vmatpush2.msra.mxu0 0.0
  %590 = vmatprep.subr.mxu0 0.0
  %591 = vmatpush2.msra.mxu0 0.0
  %592 = vmatprep.subr.mxu0 0.0
  %593 = vmatpush2.msra.mxu0 0.0
  %594 = vmatprep.subr.mxu0 0.0
  %595 = vmatpush2.msra.mxu0 0.0
  %596 = vmatprep.subr.mxu0 0.0
  %597 = vmatpush2.msra.mxu0 1.0
  %598 = vmatprep.subr.mxu0 0.0
  %599 = vmatpush2.msra.mxu0 1.0
  %600 = vmatprep.mubr.f32.mxu0 %v106
  %601 = vmatmul.mubr.f32.gmra.mxu0 %v23
  %v602 = vpop.f32.mrf.mxu0
  %v603 = vadd.f32 %v533, %v602
  %v604 = vpop.f32.mrf.mxu0
  %605 = vdwg.mxu0
  %606 = vmatprep.subr.mxu0 0.0
  %607 = vmatpush1.msra.mxu0 1.0
  %608 = vmatprep.subr.mxu0 0.0
  %609 = vmatpush1.msra.mxu0 1.0
  %610 = vmatprep.subr.mxu0 0.0
  %611 = vmatpush1.msra.mxu0 1.0
  %612 = vmatprep.subr.mxu0 0.0
  %613 = vmatpush1.msra.mxu0 1.0
  %614 = vmatprep.subr.mxu0 0.0
  %615 = vmatpush1.msra.mxu0 1.0
  %616 = vmatprep.subr.mxu0 0.0
  %617 = vmatpush1.msra.mxu0 1.0
  %618 = vmatprep.subr.mxu0 0.0
  %619 = vmatpush1.msra.mxu0 1.0
  %620 = vmatprep.subr.mxu0 0.0
  %621 = vmatpush1.msra.mxu0 1.0
  %622 = vmatprep.subr.mxu0 0.0
  %623 = vmatpush1.msra.mxu0 1.0
  %624 = vmatprep.subr.mxu0 0.0
  %625 = vmatpush1.msra.mxu0 1.0
  %626 = vmatprep.subr.mxu0 0.0
  %627 = vmatpush1.msra.mxu0 1.0
  %628 = vmatprep.subr.mxu0 0.0
  %629 = vmatpush1.msra.mxu0 1.0
  %630 = vmatprep.subr.mxu0 0.0
  %631 = vmatpush1.msra.mxu0 1.0
  %632 = vmatprep.subr.mxu0 0.0
  %633 = vmatpush1.msra.mxu0 1.0
  %634 = vmatprep.subr.mxu0 0.0
  %635 = vmatpush1.msra.mxu0 1.0
  %636 = vmatprep.subr.mxu0 0.0
  %637 = vmatpush1.msra.mxu0 1.0
  %638 = vmatprep.subr.mxu0 0.0
  %639 = vmatpush2.msra.mxu0 0.0
  %640 = vmatprep.subr.mxu0 0.0
  %641 = vmatpush2.msra.mxu0 0.0
  %642 = vmatprep.subr.mxu0 0.0
  %643 = vmatpush2.msra.mxu0 0.0
  %644 = vmatprep.subr.mxu0 0.0
  %645 = vmatpush2.msra.mxu0 0.0
  %646 = vmatprep.subr.mxu0 0.0
  %647 = vmatpush2.msra.mxu0 0.0
  %648 = vmatprep.subr.mxu0 0.0
  %649 = vmatpush2.msra.mxu0 0.0
  %650 = vmatprep.subr.mxu0 0.0
  %651 = vmatpush2.msra.mxu0 0.0
  %652 = vmatprep.subr.mxu0 0.0
  %653 = vmatpush2.msra.mxu0 0.0
  %654 = vmatprep.subr.mxu0 0.0
  %655 = vmatpush2.msra.mxu0 0.0
  %656 = vmatprep.subr.mxu0 0.0
  %657 = vmatpush2.msra.mxu0 0.0
  %658 = vmatprep.subr.mxu0 0.0
  %659 = vmatpush2.msra.mxu0 0.0
  %660 = vmatprep.subr.mxu0 0.0
  %661 = vmatpush2.msra.mxu0 0.0
  %662 = vmatprep.subr.mxu0 0.0
  %663 = vmatpush2.msra.mxu0 0.0
  %664 = vmatprep.subr.mxu0 0.0
  %665 = vmatpush2.msra.mxu0 0.0
  %666 = vmatprep.subr.mxu0 0.0
  %667 = vmatpush2.msra.mxu0 1.0
  %668 = vmatprep.subr.mxu0 0.0
  %669 = vmatpush2.msra.mxu0 1.0
  %670 = vmatprep.mubr.f32.mxu0 %v180
  %671 = vmatmul.mubr.f32.gmra.mxu0 %v28
  %v672 = vpop.f32.mrf.mxu0
  %v673 = vadd.f32 0.0, %v672
  %v674 = vpop.f32.mrf.mxu0
  %675 = vdwg.mxu0
  %676 = vmatprep.subr.mxu0 0.0
  %677 = vmatpush1.msra.mxu0 1.0
  %678 = vmatprep.subr.mxu0 0.0
  %679 = vmatpush1.msra.mxu0 1.0
  %680 = vmatprep.subr.mxu0 0.0
  %681 = vmatpush1.msra.mxu0 1.0
  %682 = vmatprep.subr.mxu0 0.0
  %683 = vmatpush1.msra.mxu0 1.0
  %684 = vmatprep.subr.mxu0 0.0
  %685 = vmatpush1.msra.mxu0 1.0
  %686 = vmatprep.subr.mxu0 0.0
  %687 = vmatpush1.msra.mxu0 1.0
  %688 = vmatprep.subr.mxu0 0.0
  %689 = vmatpush1.msra.mxu0 1.0
  %690 = vmatprep.subr.mxu0 0.0
  %691 = vmatpush1.msra.mxu0 1.0
  %692 = vmatprep.subr.mxu0 0.0
  %693 = vmatpush1.msra.mxu0 1.0
  %694 = vmatprep.subr.mxu0 0.0
  %695 = vmatpush1.msra.mxu0 1.0
  %696 = vmatprep.subr.mxu0 0.0
  %697 = vmatpush1.msra.mxu0 1.0
  %698 = vmatprep.subr.mxu0 0.0
  %699 = vmatpush1.msra.mxu0 1.0
  %700 = vmatprep.subr.mxu0 0.0
  %701 = vmatpush1.msra.mxu0 1.0
  %702 = vmatprep.subr.mxu0 0.0
  %703 = vmatpush1.msra.mxu0 1.0
  %704 = vmatprep.subr.mxu0 0.0
  %705 = vmatpush1.msra.mxu0 1.0
  %706 = vmatprep.subr.mxu0 0.0
  %707 = vmatpush1.msra.mxu0 1.0
  %708 = vmatprep.subr.mxu0 0.0
  %709 = vmatpush2.msra.mxu0 0.0
  %710 = vmatprep.subr.mxu0 0.0
  %711 = vmatpush2.msra.mxu0 0.0
  %712 = vmatprep.subr.mxu0 0.0
  %713 = vmatpush2.msra.mxu0 0.0
  %714 = vmatprep.subr.mxu0 0.0
  %715 = vmatpush2.msra.mxu0 0.0
  %716 = vmatprep.subr.mxu0 0.0
  %717 = vmatpush2.msra.mxu0 0.0
  %718 = vmatprep.subr.mxu0 0.0
  %719 = vmatpush2.msra.mxu0 0.0
  %720 = vmatprep.subr.mxu0 0.0
  %721 = vmatpush2.msra.mxu0 0.0
  %722 = vmatprep.subr.mxu0 0.0
  %723 = vmatpush2.msra.mxu0 0.0
  %724 = vmatprep.subr.mxu0 0.0
  %725 = vmatpush2.msra.mxu0 0.0
  %726 = vmatprep.subr.mxu0 0.0
  %727 = vmatpush2.msra.mxu0 0.0
  %728 = vmatprep.subr.mxu0 0.0
  %729 = vmatpush2.msra.mxu0 0.0
  %730 = vmatprep.subr.mxu0 0.0
  %731 = vmatpush2.msra.mxu0 0.0
  %732 = vmatprep.subr.mxu0 0.0
  %733 = vmatpush2.msra.mxu0 0.0
  %734 = vmatprep.subr.mxu0 0.0
  %735 = vmatpush2.msra.mxu0 0.0
  %736 = vmatprep.subr.mxu0 0.0
  %737 = vmatpush2.msra.mxu0 1.0
  %738 = vmatprep.subr.mxu0 0.0
  %739 = vmatpush2.msra.mxu0 1.0
  %740 = vmatprep.mubr.f32.mxu0 %v254
  %741 = vmatmul.mubr.f32.gmra.mxu0 %v24
  %v742 = vpop.f32.mrf.mxu0
  %v743 = vadd.f32 %v673, %v742
  %v744 = vpop.f32.mrf.mxu0
  %745 = vdwg.mxu0
  %v746 = vld [vmem:[%s2] sm:$0xff]
  %v747 = vld [vmem:[%s3] sm:$0xff]
  %vm748 = vcmask 31744
  %v750 = vsel %vm748, %v747, 0
  %vm752 = vcmask 1043456
  %v754 = vsel %vm752, %v743, 0
  %756 = vmatprep.subr.mxu0 0.0
  %757 = vmatpush1.msra.mxu0 0.0
  %758 = vmatprep.subr.mxu0 0.0
  %759 = vmatpush1.msra.mxu0 0.0
  %760 = vmatprep.subr.mxu0 0.0
  %761 = vmatpush1.msra.mxu0 0.0
  %762 = vmatprep.subr.mxu0 0.0
  %763 = vmatpush1.msra.mxu0 0.0
  %764 = vmatprep.subr.mxu0 0.0
  %765 = vmatpush1.msra.mxu0 0.0
  %766 = vmatprep.subr.mxu0 0.0
  %767 = vmatpush1.msra.mxu0 0.0
  %768 = vmatprep.subr.mxu0 0.0
  %769 = vmatpush1.msra.mxu0 0.0
  %770 = vmatprep.subr.mxu0 0.0
  %771 = vmatpush1.msra.mxu0 0.0
  %772 = vmatprep.subr.mxu0 0.0
  %773 = vmatpush1.msra.mxu0 0.0
  %774 = vmatprep.subr.mxu0 0.0
  %775 = vmatpush1.msra.mxu0 0.0
  %776 = vmatprep.subr.mxu0 0.0
  %777 = vmatpush1.msra.mxu0 0.0
  %778 = vmatprep.subr.mxu0 0.0
  %779 = vmatpush1.msra.mxu0 0.0
  %780 = vmatprep.subr.mxu0 0.0
  %781 = vmatpush1.msra.mxu0 0.0
  %782 = vmatprep.subr.mxu0 0.0
  %783 = vmatpush1.msra.mxu0 0.0
  %784 = vmatprep.subr.mxu0 0.0
  %785 = vmatpush1.msra.mxu0 0.0
  %786 = vmatprep.subr.mxu0 0.0
  %787 = vmatpush1.msra.mxu0 %v754
  %788 = vmatprep.subr.mxu0 0.0
  %789 = vmatpush2.msra.mxu0 0.0
  %790 = vmatprep.subr.mxu0 0.0
  %791 = vmatpush2.msra.mxu0 0.0
  %792 = vmatprep.subr.mxu0 0.0
  %793 = vmatpush2.msra.mxu0 0.0
  %794 = vmatprep.subr.mxu0 0.0
  %795 = vmatpush2.msra.mxu0 0.0
  %796 = vmatprep.subr.mxu0 0.0
  %797 = vmatpush2.msra.mxu0 0.0
  %798 = vmatprep.subr.mxu0 0.0
  %799 = vmatpush2.msra.mxu0 0.0
  %800 = vmatprep.subr.mxu0 0.0
  %801 = vmatpush2.msra.mxu0 0.0
  %802 = vmatprep.subr.mxu0 0.0
  %803 = vmatpush2.msra.mxu0 0.0
  %804 = vmatprep.subr.mxu0 0.0
  %805 = vmatpush2.msra.mxu0 0.0
  %806 = vmatprep.subr.mxu0 0.0
  %807 = vmatpush2.msra.mxu0 0.0
  %808 = vmatprep.subr.mxu0 0.0
  %809 = vmatpush2.msra.mxu0 0.0
  %810 = vmatprep.subr.mxu0 0.0
  %811 = vmatpush2.msra.mxu0 0.0
  %812 = vmatprep.subr.mxu0 0.0
  %813 = vmatpush2.msra.mxu0 0.0
  %814 = vmatprep.subr.mxu0 0.0
  %815 = vmatpush2.msra.mxu0 0.0
  %816 = vmatprep.subr.mxu0 0.0
  %817 = vmatpush2.msra.mxu0 0.0
  %818 = vmatprep.subr.mxu0 0.0
  %819 = vmatpush2.msra.mxu0 0.0
  %820 = vmatprep.mubr.f32.mxu0 0.0
  %821 = vmatmul.mubr.f32.gmra.mxu0 %v750
  %v822 = vpop.f32.mrf.mxu0
  %v823 = vadd.f32 0.0, %v822
  %v824 = vpop.f32.mrf.mxu0
  %825 = vdwg.mxu0
  %v827 = vsel %vm748, %v746, 0
  %v830 = vsel %vm752, %v603, 0
  %832 = vmatprep.subr.mxu0 0.0
  %833 = vmatpush1.msra.mxu0 0.0
  %834 = vmatprep.subr.mxu0 0.0
  %835 = vmatpush1.msra.mxu0 0.0
  %836 = vmatprep.subr.mxu0 0.0
  %837 = vmatpush1.msra.mxu0 0.0
  %838 = vmatprep.subr.mxu0 0.0
  %839 = vmatpush1.msra.mxu0 0.0
  %840 = vmatprep.subr.mxu0 0.0
  %841 = vmatpush1.msra.mxu0 0.0
  %842 = vmatprep.subr.mxu0 0.0
  %843 = vmatpush1.msra.mxu0 0.0
  %844 = vmatprep.subr.mxu0 0.0
  %845 = vmatpush1.msra.mxu0 0.0
  %846 = vmatprep.subr.mxu0 0.0
  %847 = vmatpush1.msra.mxu0 0.0
  %848 = vmatprep.subr.mxu0 0.0
  %849 = vmatpush1.msra.mxu0 0.0
  %850 = vmatprep.subr.mxu0 0.0
  %851 = vmatpush1.msra.mxu0 0.0
  %852 = vmatprep.subr.mxu0 0.0
  %853 = vmatpush1.msra.mxu0 0.0
  %854 = vmatprep.subr.mxu0 0.0
  %855 = vmatpush1.msra.mxu0 0.0
  %856 = vmatprep.subr.mxu0 0.0
  %857 = vmatpush1.msra.mxu0 0.0
  %858 = vmatprep.subr.mxu0 0.0
  %859 = vmatpush1.msra.mxu0 0.0
  %860 = vmatprep.subr.mxu0 0.0
  %861 = vmatpush1.msra.mxu0 0.0
  %862 = vmatprep.subr.mxu0 0.0
  %863 = vmatpush1.msra.mxu0 %v830
  %864 = vmatprep.subr.mxu0 0.0
  %865 = vmatpush2.msra.mxu0 0.0
  %866 = vmatprep.subr.mxu0 0.0
  %867 = vmatpush2.msra.mxu0 0.0
  %868 = vmatprep.subr.mxu0 0.0
  %869 = vmatpush2.msra.mxu0 0.0
  %870 = vmatprep.subr.mxu0 0.0
  %871 = vmatpush2.msra.mxu0 0.0
  %872 = vmatprep.subr.mxu0 0.0
  %873 = vmatpush2.msra.mxu0 0.0
  %874 = vmatprep.subr.mxu0 0.0
  %875 = vmatpush2.msra.mxu0 0.0
  %876 = vmatprep.subr.mxu0 0.0
  %877 = vmatpush2.msra.mxu0 0.0
  %878 = vmatprep.subr.mxu0 0.0
  %879 = vmatpush2.msra.mxu0 0.0
  %880 = vmatprep.subr.mxu0 0.0
  %881 = vmatpush2.msra.mxu0 0.0
  %882 = vmatprep.subr.mxu0 0.0
  %883 = vmatpush2.msra.mxu0 0.0
  %884 = vmatprep.subr.mxu0 0.0
  %885 = vmatpush2.msra.mxu0 0.0
  %886 = vmatprep.subr.mxu0 0.0
  %887 = vmatpush2.msra.mxu0 0.0
  %888 = vmatprep.subr.mxu0 0.0
  %889 = vmatpush2.msra.mxu0 0.0
  %890 = vmatprep.subr.mxu0 0.0
  %891 = vmatpush2.msra.mxu0 0.0
  %892 = vmatprep.subr.mxu0 0.0
  %893 = vmatpush2.msra.mxu0 0.0
  %894 = vmatprep.subr.mxu0 0.0
  %895 = vmatpush2.msra.mxu0 0.0
  %896 = vmatprep.mubr.f32.mxu0 0.0
  %897 = vmatmul.mubr.f32.gmra.mxu0 %v827
  %v898 = vpop.f32.mrf.mxu0
  %v899 = vadd.f32 %v823, %v898
  %v900 = vpop.f32.mrf.mxu0
  %901 = vdwg.mxu0
  %v903 = vsel %vm752, %v175, 0
  %905 = vmatprep.subr.mxu0 0.0
  %906 = vmatpush1.msra.mxu0 0.0
  %907 = vmatprep.subr.mxu0 0.0
  %908 = vmatpush1.msra.mxu0 0.0
  %909 = vmatprep.subr.mxu0 0.0
  %910 = vmatpush1.msra.mxu0 0.0
  %911 = vmatprep.subr.mxu0 0.0
  %912 = vmatpush1.msra.mxu0 0.0
  %913 = vmatprep.subr.mxu0 0.0
  %914 = vmatpush1.msra.mxu0 0.0
  %915 = vmatprep.subr.mxu0 0.0
  %916 = vmatpush1.msra.mxu0 0.0
  %917 = vmatprep.subr.mxu0 0.0
  %918 = vmatpush1.msra.mxu0 0.0
  %919 = vmatprep.subr.mxu0 0.0
  %920 = vmatpush1.msra.mxu0 0.0
  %921 = vmatprep.subr.mxu0 0.0
  %922 = vmatpush1.msra.mxu0 0.0
  %923 = vmatprep.subr.mxu0 0.0
  %924 = vmatpush1.msra.mxu0 0.0
  %925 = vmatprep.subr.mxu0 0.0
  %926 = vmatpush1.msra.mxu0 0.0
  %927 = vmatprep.subr.mxu0 0.0
  %928 = vmatpush1.msra.mxu0 0.0
  %929 = vmatprep.subr.mxu0 0.0
  %930 = vmatpush1.msra.mxu0 0.0
  %931 = vmatprep.subr.mxu0 0.0
  %932 = vmatpush1.msra.mxu0 0.0
  %933 = vmatprep.subr.mxu0 0.0
  %934 = vmatpush1.msra.mxu0 0.0
  %935 = vmatprep.subr.mxu0 0.0
  %936 = vmatpush1.msra.mxu0 %v903
  %937 = vmatprep.subr.mxu0 0.0
  %938 = vmatpush2.msra.mxu0 0.0
  %939 = vmatprep.subr.mxu0 0.0
  %940 = vmatpush2.msra.mxu0 0.0
  %941 = vmatprep.subr.mxu0 0.0
  %942 = vmatpush2.msra.mxu0 0.0
  %943 = vmatprep.subr.mxu0 0.0
  %944 = vmatpush2.msra.mxu0 0.0
  %945 = vmatprep.subr.mxu0 0.0
  %946 = vmatpush2.msra.mxu0 0.0
  %947 = vmatprep.subr.mxu0 0.0
  %948 = vmatpush2.msra.mxu0 0.0
  %949 = vmatprep.subr.mxu0 0.0
  %950 = vmatpush2.msra.mxu0 0.0
  %951 = vmatprep.subr.mxu0 0.0
  %952 = vmatpush2.msra.mxu0 0.0
  %953 = vmatprep.subr.mxu0 0.0
  %954 = vmatpush2.msra.mxu0 0.0
  %955 = vmatprep.subr.mxu0 0.0
  %956 = vmatpush2.msra.mxu0 0.0
  %957 = vmatprep.subr.mxu0 0.0
  %958 = vmatpush2.msra.mxu0 0.0
  %959 = vmatprep.subr.mxu0 0.0
  %960 = vmatpush2.msra.mxu0 0.0
  %961 = vmatprep.subr.mxu0 0.0
  %962 = vmatpush2.msra.mxu0 0.0
  %963 = vmatprep.subr.mxu0 0.0
  %964 = vmatpush2.msra.mxu0 0.0
  %965 = vmatprep.subr.mxu0 0.0
  %966 = vmatpush2.msra.mxu0 0.0
  %967 = vmatprep.subr.mxu0 0.0
  %968 = vmatpush2.msra.mxu0 0.0
  %969 = vmatprep.mubr.f32.mxu0 0.0
  %970 = vmatmul.mubr.f32.gmra.mxu0 %v827
  %v971 = vpop.f32.mrf.mxu0
  %v972 = vadd.f32 0.0, %v971
  %v973 = vpop.f32.mrf.mxu0
  %974 = vdwg.mxu0
  %v975 = vmul.f32 %v972, %v746
  %v976 = vsel %vm748, %v975, 0.0
  %977 = vadd.xlane.f32.xlu0 %v976
  %v978 = vpop.xlane.xlu0 %977
  %v980 = vsel %vm752, %v323, 0
  %982 = vmatprep.subr.mxu0 0.0
  %983 = vmatpush1.msra.mxu0 0.0
  %984 = vmatprep.subr.mxu0 0.0
  %985 = vmatpush1.msra.mxu0 0.0
  %986 = vmatprep.subr.mxu0 0.0
  %987 = vmatpush1.msra.mxu0 0.0
  %988 = vmatprep.subr.mxu0 0.0
  %989 = vmatpush1.msra.mxu0 0.0
  %990 = vmatprep.subr.mxu0 0.0
  %991 = vmatpush1.msra.mxu0 0.0
  %992 = vmatprep.subr.mxu0 0.0
  %993 = vmatpush1.msra.mxu0 0.0
  %994 = vmatprep.subr.mxu0 0.0
  %995 = vmatpush1.msra.mxu0 0.0
  %996 = vmatprep.subr.mxu0 0.0
  %997 = vmatpush1.msra.mxu0 0.0
  %998 = vmatprep.subr.mxu0 0.0
  %999 = vmatpush1.msra.mxu0 0.0
  %1000 = vmatprep.subr.mxu0 0.0
  %1001 = vmatpush1.msra.mxu0 0.0
  %1002 = vmatprep.subr.mxu0 0.0
  %1003 = vmatpush1.msra.mxu0 0.0
  %1004 = vmatprep.subr.mxu0 0.0
  %1005 = vmatpush1.msra.mxu0 0.0
  %1006 = vmatprep.subr.mxu0 0.0
  %1007 = vmatpush1.msra.mxu0 0.0
  %1008 = vmatprep.subr.mxu0 0.0
  %1009 = vmatpush1.msra.mxu0 0.0
  %1010 = vmatprep.subr.mxu0 0.0
  %1011 = vmatpush1.msra.mxu0 0.0
  %1012 = vmatprep.subr.mxu0 0.0
  %1013 = vmatpush1.msra.mxu0 %v980
  %1014 = vmatprep.subr.mxu0 0.0
  %1015 = vmatpush2.msra.mxu0 0.0
  %1016 = vmatprep.subr.mxu0 0.0
  %1017 = vmatpush2.msra.mxu0 0.0
  %1018 = vmatprep.subr.mxu0 0.0
  %1019 = vmatpush2.msra.mxu0 0.0
  %1020 = vmatprep.subr.mxu0 0.0
  %1021 = vmatpush2.msra.mxu0 0.0
  %1022 = vmatprep.subr.mxu0 0.0
  %1023 = vmatpush2.msra.mxu0 0.0
  %1024 = vmatprep.subr.mxu0 0.0
  %1025 = vmatpush2.msra.mxu0 0.0
  %1026 = vmatprep.subr.mxu0 0.0
  %1027 = vmatpush2.msra.mxu0 0.0
  %1028 = vmatprep.subr.mxu0 0.0
  %1029 = vmatpush2.msra.mxu0 0.0
  %1030 = vmatprep.subr.mxu0 0.0
  %1031 = vmatpush2.msra.mxu0 0.0
  %1032 = vmatprep.subr.mxu0 0.0
  %1033 = vmatpush2.msra.mxu0 0.0
  %1034 = vmatprep.subr.mxu0 0.0
  %1035 = vmatpush2.msra.mxu0 0.0
  %1036 = vmatprep.subr.mxu0 0.0
  %1037 = vmatpush2.msra.mxu0 0.0
  %1038 = vmatprep.subr.mxu0 0.0
  %1039 = vmatpush2.msra.mxu0 0.0
  %1040 = vmatprep.subr.mxu0 0.0
  %1041 = vmatpush2.msra.mxu0 0.0
  %1042 = vmatprep.subr.mxu0 0.0
  %1043 = vmatpush2.msra.mxu0 0.0
  %1044 = vmatprep.subr.mxu0 0.0
  %1045 = vmatpush2.msra.mxu0 0.0
  %1046 = vmatprep.mubr.f32.mxu0 0.0
  %1047 = vmatmul.mubr.f32.gmra.mxu0 %v827
  %v1048 = vpop.f32.mrf.mxu0
  %v1049 = vadd.f32 0.0, %v1048
  %v1050 = vpop.f32.mrf.mxu0
  %1051 = vdwg.mxu0
  %v1052 = vmul.f32 %v1049, %v747
  %v1053 = vsel %vm748, %v1052, 0.0
  %1054 = vadd.xlane.f32.xlu0 %v1053
  %v1055 = vpop.xlane.xlu0 %1054
  %v1056 = vmul.f32 %v1055, 2.0
  %v1057 = vadd.f32 %v978, %v1056
  %v1059 = vsel %vm752, %v463, 0
  %1061 = vmatprep.subr.mxu0 0.0
  %1062 = vmatpush1.msra.mxu0 0.0
  %1063 = vmatprep.subr.mxu0 0.0
  %1064 = vmatpush1.msra.mxu0 0.0
  %1065 = vmatprep.subr.mxu0 0.0
  %1066 = vmatpush1.msra.mxu0 0.0
  %1067 = vmatprep.subr.mxu0 0.0
  %1068 = vmatpush1.msra.mxu0 0.0
  %1069 = vmatprep.subr.mxu0 0.0
  %1070 = vmatpush1.msra.mxu0 0.0
  %1071 = vmatprep.subr.mxu0 0.0
  %1072 = vmatpush1.msra.mxu0 0.0
  %1073 = vmatprep.subr.mxu0 0.0
  %1074 = vmatpush1.msra.mxu0 0.0
  %1075 = vmatprep.subr.mxu0 0.0
  %1076 = vmatpush1.msra.mxu0 0.0
  %1077 = vmatprep.subr.mxu0 0.0
  %1078 = vmatpush1.msra.mxu0 0.0
  %1079 = vmatprep.subr.mxu0 0.0
  %1080 = vmatpush1.msra.mxu0 0.0
  %1081 = vmatprep.subr.mxu0 0.0
  %1082 = vmatpush1.msra.mxu0 0.0
  %1083 = vmatprep.subr.mxu0 0.0
  %1084 = vmatpush1.msra.mxu0 0.0
  %1085 = vmatprep.subr.mxu0 0.0
  %1086 = vmatpush1.msra.mxu0 0.0
  %1087 = vmatprep.subr.mxu0 0.0
  %1088 = vmatpush1.msra.mxu0 0.0
  %1089 = vmatprep.subr.mxu0 0.0
  %1090 = vmatpush1.msra.mxu0 0.0
  %1091 = vmatprep.subr.mxu0 0.0
  %1092 = vmatpush1.msra.mxu0 %v1059
  %1093 = vmatprep.subr.mxu0 0.0
  %1094 = vmatpush2.msra.mxu0 0.0
  %1095 = vmatprep.subr.mxu0 0.0
  %1096 = vmatpush2.msra.mxu0 0.0
  %1097 = vmatprep.subr.mxu0 0.0
  %1098 = vmatpush2.msra.mxu0 0.0
  %1099 = vmatprep.subr.mxu0 0.0
  %1100 = vmatpush2.msra.mxu0 0.0
  %1101 = vmatprep.subr.mxu0 0.0
  %1102 = vmatpush2.msra.mxu0 0.0
  %1103 = vmatprep.subr.mxu0 0.0
  %1104 = vmatpush2.msra.mxu0 0.0
  %1105 = vmatprep.subr.mxu0 0.0
  %1106 = vmatpush2.msra.mxu0 0.0
  %1107 = vmatprep.subr.mxu0 0.0
  %1108 = vmatpush2.msra.mxu0 0.0
  %1109 = vmatprep.subr.mxu0 0.0
  %1110 = vmatpush2.msra.mxu0 0.0
  %1111 = vmatprep.subr.mxu0 0.0
  %1112 = vmatpush2.msra.mxu0 0.0
  %1113 = vmatprep.subr.mxu0 0.0
  %1114 = vmatpush2.msra.mxu0 0.0
  %1115 = vmatprep.subr.mxu0 0.0
  %1116 = vmatpush2.msra.mxu0 0.0
  %1117 = vmatprep.subr.mxu0 0.0
  %1118 = vmatpush2.msra.mxu0 0.0
  %1119 = vmatprep.subr.mxu0 0.0
  %1120 = vmatpush2.msra.mxu0 0.0
  %1121 = vmatprep.subr.mxu0 0.0
  %1122 = vmatpush2.msra.mxu0 0.0
  %1123 = vmatprep.subr.mxu0 0.0
  %1124 = vmatpush2.msra.mxu0 0.0
  %1125 = vmatprep.mubr.f32.mxu0 0.0
  %1126 = vmatmul.mubr.f32.gmra.mxu0 %v750
  %v1127 = vpop.f32.mrf.mxu0
  %v1128 = vadd.f32 0.0, %v1127
  %v1129 = vpop.f32.mrf.mxu0
  %1130 = vdwg.mxu0
  %v1131 = vmul.f32 %v1128, %v747
  %v1132 = vsel %vm748, %v1131, 0.0
  %1133 = vadd.xlane.f32.xlu0 %v1132
  %v1134 = vpop.xlane.xlu0 %1133
  %v1135 = vadd.f32 %v1057, %v1134
  %v1136 = vrcp.pop 288.0
  %v1137 = vmul.f32 %v899, %v1136
  %v1138 = vmul.f32 %v1135, %v1136
  %v1139 = vmul.f32 %v1137, %v1137
  %v1140 = vsub.f32 %v1138, %v1139
  %v1141 = vmax.f32 %v1140, 0.0
  %v1142 = vld [vmem:[%s4] sm:$0xff]
  %v1143 = vadd.f32 %v1141, 1e-05
  %v1144 = vrsqrt.pop %v1143
  %v1145 = vmul.f32 %v1142, %v1144
  %v1146 = vld [vmem:[%s5] sm:$0xff]
  %v1147 = vmul.f32 %v1137, %v1145
  %v1148 = vsub.f32 %v1146, %v1147
  %v1149 = vsel %vm752, %v24, 0
  %v1151 = vsel %vm752, %v253, 0
  %1153 = vmatprep.subr.mxu0 0.0
  %1154 = vmatpush1.msra.mxu0 0.0
  %1155 = vmatprep.subr.mxu0 0.0
  %1156 = vmatpush1.msra.mxu0 0.0
  %1157 = vmatprep.subr.mxu0 0.0
  %1158 = vmatpush1.msra.mxu0 0.0
  %1159 = vmatprep.subr.mxu0 0.0
  %1160 = vmatpush1.msra.mxu0 0.0
  %1161 = vmatprep.subr.mxu0 0.0
  %1162 = vmatpush1.msra.mxu0 0.0
  %1163 = vmatprep.subr.mxu0 0.0
  %1164 = vmatpush1.msra.mxu0 0.0
  %1165 = vmatprep.subr.mxu0 0.0
  %1166 = vmatpush1.msra.mxu0 0.0
  %1167 = vmatprep.subr.mxu0 0.0
  %1168 = vmatpush1.msra.mxu0 0.0
  %1169 = vmatprep.subr.mxu0 0.0
  %1170 = vmatpush1.msra.mxu0 0.0
  %1171 = vmatprep.subr.mxu0 0.0
  %1172 = vmatpush1.msra.mxu0 0.0
  %1173 = vmatprep.subr.mxu0 0.0
  %1174 = vmatpush1.msra.mxu0 0.0
  %1175 = vmatprep.subr.mxu0 0.0
  %1176 = vmatpush1.msra.mxu0 0.0
  %1177 = vmatprep.subr.mxu0 0.0
  %1178 = vmatpush1.msra.mxu0 0.0
  %1179 = vmatprep.subr.mxu0 0.0
  %1180 = vmatpush1.msra.mxu0 0.0
  %1181 = vmatprep.subr.mxu0 0.0
  %1182 = vmatpush1.msra.mxu0 0.0
  %1183 = vmatprep.subr.mxu0 %v1151
  %1184 = vmatpush1.msra.mxu0 %v1149
  %1185 = vmatprep.subr.mxu0 0.0
  %1186 = vmatpush2.msra.mxu0 0.0
  %1187 = vmatprep.subr.mxu0 0.0
  %1188 = vmatpush2.msra.mxu0 0.0
  %1189 = vmatprep.subr.mxu0 0.0
  %1190 = vmatpush2.msra.mxu0 0.0
  %1191 = vmatprep.subr.mxu0 0.0
  %1192 = vmatpush2.msra.mxu0 0.0
  %1193 = vmatprep.subr.mxu0 0.0
  %1194 = vmatpush2.msra.mxu0 0.0
  %1195 = vmatprep.subr.mxu0 0.0
  %1196 = vmatpush2.msra.mxu0 0.0
  %1197 = vmatprep.subr.mxu0 0.0
  %1198 = vmatpush2.msra.mxu0 0.0
  %1199 = vmatprep.subr.mxu0 0.0
  %1200 = vmatpush2.msra.mxu0 0.0
  %1201 = vmatprep.subr.mxu0 0.0
  %1202 = vmatpush2.msra.mxu0 0.0
  %1203 = vmatprep.subr.mxu0 0.0
  %1204 = vmatpush2.msra.mxu0 0.0
  %1205 = vmatprep.subr.mxu0 0.0
  %1206 = vmatpush2.msra.mxu0 0.0
  %1207 = vmatprep.subr.mxu0 0.0
  %1208 = vmatpush2.msra.mxu0 0.0
  %1209 = vmatprep.subr.mxu0 0.0
  %1210 = vmatpush2.msra.mxu0 0.0
  %1211 = vmatprep.subr.mxu0 0.0
  %1212 = vmatpush2.msra.mxu0 0.0
  %1213 = vmatprep.subr.mxu0 0.0
  %1214 = vmatpush2.msra.mxu0 0.0
  %1215 = vmatprep.subr.mxu0 0.0
  %1216 = vmatpush2.msra.mxu0 0.0
  %1217 = vmatprep.mubr.f32.mxu0 0.0
  %1218 = vmatmul.mubr.f32.gmra.mxu0 %v750
  %v1219 = vpop.f32.mrf.mxu0
  %v1220 = vadd.f32 0.0, %v1219
  %v1221 = vpop.f32.mrf.mxu0
  %v1222 = vadd.f32 0.0, %v1221
  %1223 = vdwg.mxu0
  %v1224 = vsel %vm752, %v23, 0
  %v1226 = vsel %vm752, %v105, 0
  %1228 = vmatprep.subr.mxu0 0.0
  %1229 = vmatpush1.msra.mxu0 0.0
  %1230 = vmatprep.subr.mxu0 0.0
  %1231 = vmatpush1.msra.mxu0 0.0
  %1232 = vmatprep.subr.mxu0 0.0
  %1233 = vmatpush1.msra.mxu0 0.0
  %1234 = vmatprep.subr.mxu0 0.0
  %1235 = vmatpush1.msra.mxu0 0.0
  %1236 = vmatprep.subr.mxu0 0.0
  %1237 = vmatpush1.msra.mxu0 0.0
  %1238 = vmatprep.subr.mxu0 0.0
  %1239 = vmatpush1.msra.mxu0 0.0
  %1240 = vmatprep.subr.mxu0 0.0
  %1241 = vmatpush1.msra.mxu0 0.0
  %1242 = vmatprep.subr.mxu0 0.0
  %1243 = vmatpush1.msra.mxu0 0.0
  %1244 = vmatprep.subr.mxu0 0.0
  %1245 = vmatpush1.msra.mxu0 0.0
  %1246 = vmatprep.subr.mxu0 0.0
  %1247 = vmatpush1.msra.mxu0 0.0
  %1248 = vmatprep.subr.mxu0 0.0
  %1249 = vmatpush1.msra.mxu0 0.0
  %1250 = vmatprep.subr.mxu0 0.0
  %1251 = vmatpush1.msra.mxu0 0.0
  %1252 = vmatprep.subr.mxu0 0.0
  %1253 = vmatpush1.msra.mxu0 0.0
  %1254 = vmatprep.subr.mxu0 0.0
  %1255 = vmatpush1.msra.mxu0 0.0
  %1256 = vmatprep.subr.mxu0 0.0
  %1257 = vmatpush1.msra.mxu0 0.0
  %1258 = vmatprep.subr.mxu0 %v1226
  %1259 = vmatpush1.msra.mxu0 %v1224
  %1260 = vmatprep.subr.mxu0 0.0
  %1261 = vmatpush2.msra.mxu0 0.0
  %1262 = vmatprep.subr.mxu0 0.0
  %1263 = vmatpush2.msra.mxu0 0.0
  %1264 = vmatprep.subr.mxu0 0.0
  %1265 = vmatpush2.msra.mxu0 0.0
  %1266 = vmatprep.subr.mxu0 0.0
  %1267 = vmatpush2.msra.mxu0 0.0
  %1268 = vmatprep.subr.mxu0 0.0
  %1269 = vmatpush2.msra.mxu0 0.0
  %1270 = vmatprep.subr.mxu0 0.0
  %1271 = vmatpush2.msra.mxu0 0.0
  %1272 = vmatprep.subr.mxu0 0.0
  %1273 = vmatpush2.msra.mxu0 0.0
  %1274 = vmatprep.subr.mxu0 0.0
  %1275 = vmatpush2.msra.mxu0 0.0
  %1276 = vmatprep.subr.mxu0 0.0
  %1277 = vmatpush2.msra.mxu0 0.0
  %1278 = vmatprep.subr.mxu0 0.0
  %1279 = vmatpush2.msra.mxu0 0.0
  %1280 = vmatprep.subr.mxu0 0.0
  %1281 = vmatpush2.msra.mxu0 0.0
  %1282 = vmatprep.subr.mxu0 0.0
  %1283 = vmatpush2.msra.mxu0 0.0
  %1284 = vmatprep.subr.mxu0 0.0
  %1285 = vmatpush2.msra.mxu0 0.0
  %1286 = vmatprep.subr.mxu0 0.0
  %1287 = vmatpush2.msra.mxu0 0.0
  %1288 = vmatprep.subr.mxu0 0.0
  %1289 = vmatpush2.msra.mxu0 0.0
  %1290 = vmatprep.subr.mxu0 0.0
  %1291 = vmatpush2.msra.mxu0 0.0
  %1292 = vmatprep.mubr.f32.mxu0 0.0
  %1293 = vmatmul.mubr.f32.gmra.mxu0 %v827
  %v1294 = vpop.f32.mrf.mxu0
  %v1295 = vadd.f32 %v1220, %v1294
  %v1296 = vpop.f32.mrf.mxu0
  %v1297 = vadd.f32 %v1222, %v1296
  %1298 = vdwg.mxu0
  %1300 = vset.pattern.permute.xlu0 0
  %1301 = vperm.xlu0 %1300, %v1145
  %v1302 = vpop.permute.xlu0 %1301
  %v1304 = vmul.f32 %v1295, %v1302
  %v1305 = vmul.f32 %v1297, %v1302
  %1307 = vset.pattern.permute.xlu0 0
  %1308 = vperm.xlu0 %1307, %v1148
  %v1309 = vpop.permute.xlu0 %1308
  %v1311 = vadd.f32 %v1304, %v1309
  %v1312 = vadd.f32 %v1305, %v1309
  %v1313 = vmax.f32 %v1311, 0.0
  %v1314 = vmax.f32 %v1312, 0.0
  %1315 = vst [vmem:[%s6] sm:$0xff] %v1313
  %1316 = vst.msk [vmem:[%s6 + $0x8] sm:$0xff] %vm31, %v1314
  %v1317 = vld [vmem:[%s25] sm:$0xff]
  %v1318 = vld [vmem:[%s27] sm:$0xff]
  %v1320 = vcombine.high %v1318, %v1318
  %v1321 = vsel %vm752, %v1318, 0
  %v1323 = vsel %vm752, %v1320, 0
  %1325 = vmatprep.subr.mxu0 0.0
  %1326 = vmatpush1.msra.mxu0 0.0
  %1327 = vmatprep.subr.mxu0 0.0
  %1328 = vmatpush1.msra.mxu0 0.0
  %1329 = vmatprep.subr.mxu0 0.0
  %1330 = vmatpush1.msra.mxu0 0.0
  %1331 = vmatprep.subr.mxu0 0.0
  %1332 = vmatpush1.msra.mxu0 0.0
  %1333 = vmatprep.subr.mxu0 0.0
  %1334 = vmatpush1.msra.mxu0 0.0
  %1335 = vmatprep.subr.mxu0 0.0
  %1336 = vmatpush1.msra.mxu0 0.0
  %1337 = vmatprep.subr.mxu0 0.0
  %1338 = vmatpush1.msra.mxu0 0.0
  %1339 = vmatprep.subr.mxu0 0.0
  %1340 = vmatpush1.msra.mxu0 0.0
  %1341 = vmatprep.subr.mxu0 0.0
  %1342 = vmatpush1.msra.mxu0 0.0
  %1343 = vmatprep.subr.mxu0 0.0
  %1344 = vmatpush1.msra.mxu0 0.0
  %1345 = vmatprep.subr.mxu0 0.0
  %1346 = vmatpush1.msra.mxu0 0.0
  %1347 = vmatprep.subr.mxu0 0.0
  %1348 = vmatpush1.msra.mxu0 0.0
  %1349 = vmatprep.subr.mxu0 0.0
  %1350 = vmatpush1.msra.mxu0 0.0
  %1351 = vmatprep.subr.mxu0 0.0
  %1352 = vmatpush1.msra.mxu0 0.0
  %1353 = vmatprep.subr.mxu0 0.0
  %1354 = vmatpush1.msra.mxu0 0.0
  %1355 = vmatprep.subr.mxu0 %v1323
  %1356 = vmatpush1.msra.mxu0 %v1321
  %1357 = vmatprep.subr.mxu0 0.0
  %1358 = vmatpush2.msra.mxu0 0.0
  %1359 = vmatprep.subr.mxu0 0.0
  %1360 = vmatpush2.msra.mxu0 0.0
  %1361 = vmatprep.subr.mxu0 0.0
  %1362 = vmatpush2.msra.mxu0 0.0
  %1363 = vmatprep.subr.mxu0 0.0
  %1364 = vmatpush2.msra.mxu0 0.0
  %1365 = vmatprep.subr.mxu0 0.0
  %1366 = vmatpush2.msra.mxu0 0.0
  %1367 = vmatprep.subr.mxu0 0.0
  %1368 = vmatpush2.msra.mxu0 0.0
  %1369 = vmatprep.subr.mxu0 0.0
  %1370 = vmatpush2.msra.mxu0 0.0
  %1371 = vmatprep.subr.mxu0 0.0
  %1372 = vmatpush2.msra.mxu0 0.0
  %1373 = vmatprep.subr.mxu0 0.0
  %1374 = vmatpush2.msra.mxu0 0.0
  %1375 = vmatprep.subr.mxu0 0.0
  %1376 = vmatpush2.msra.mxu0 0.0
  %1377 = vmatprep.subr.mxu0 0.0
  %1378 = vmatpush2.msra.mxu0 0.0
  %1379 = vmatprep.subr.mxu0 0.0
  %1380 = vmatpush2.msra.mxu0 0.0
  %1381 = vmatprep.subr.mxu0 0.0
  %1382 = vmatpush2.msra.mxu0 0.0
  %1383 = vmatprep.subr.mxu0 0.0
  %1384 = vmatpush2.msra.mxu0 0.0
  %1385 = vmatprep.subr.mxu0 0.0
  %1386 = vmatpush2.msra.mxu0 0.0
  %1387 = vmatprep.subr.mxu0 0.0
  %1388 = vmatpush2.msra.mxu0 0.0
  %1389 = vmatprep.mubr.f32.mxu0 0.0
  %1390 = vmatmul.mubr.f32.gmra.mxu0 %v750
  %v1391 = vpop.f32.mrf.mxu0
  %v1392 = vadd.f32 0.0, %v1391
  %v1393 = vpop.f32.mrf.mxu0
  %v1394 = vadd.f32 0.0, %v1393
  %1395 = vdwg.mxu0
  %v1397 = vcombine.high %v1317, %v1317
  %v1398 = vsel %vm752, %v1317, 0
  %v1400 = vsel %vm752, %v1397, 0
  %1402 = vmatprep.subr.mxu0 0.0
  %1403 = vmatpush1.msra.mxu0 0.0
  %1404 = vmatprep.subr.mxu0 0.0
  %1405 = vmatpush1.msra.mxu0 0.0
  %1406 = vmatprep.subr.mxu0 0.0
  %1407 = vmatpush1.msra.mxu0 0.0
  %1408 = vmatprep.subr.mxu0 0.0
  %1409 = vmatpush1.msra.mxu0 0.0
  %1410 = vmatprep.subr.mxu0 0.0
  %1411 = vmatpush1.msra.mxu0 0.0
  %1412 = vmatprep.subr.mxu0 0.0
  %1413 = vmatpush1.msra.mxu0 0.0
  %1414 = vmatprep.subr.mxu0 0.0
  %1415 = vmatpush1.msra.mxu0 0.0
  %1416 = vmatprep.subr.mxu0 0.0
  %1417 = vmatpush1.msra.mxu0 0.0
  %1418 = vmatprep.subr.mxu0 0.0
  %1419 = vmatpush1.msra.mxu0 0.0
  %1420 = vmatprep.subr.mxu0 0.0
  %1421 = vmatpush1.msra.mxu0 0.0
  %1422 = vmatprep.subr.mxu0 0.0
  %1423 = vmatpush1.msra.mxu0 0.0
  %1424 = vmatprep.subr.mxu0 0.0
  %1425 = vmatpush1.msra.mxu0 0.0
  %1426 = vmatprep.subr.mxu0 0.0
  %1427 = vmatpush1.msra.mxu0 0.0
  %1428 = vmatprep.subr.mxu0 0.0
  %1429 = vmatpush1.msra.mxu0 0.0
  %1430 = vmatprep.subr.mxu0 0.0
  %1431 = vmatpush1.msra.mxu0 0.0
  %1432 = vmatprep.subr.mxu0 %v1400
  %1433 = vmatpush1.msra.mxu0 %v1398
  %1434 = vmatprep.subr.mxu0 0.0
  %1435 = vmatpush2.msra.mxu0 0.0
  %1436 = vmatprep.subr.mxu0 0.0
  %1437 = vmatpush2.msra.mxu0 0.0
  %1438 = vmatprep.subr.mxu0 0.0
  %1439 = vmatpush2.msra.mxu0 0.0
  %1440 = vmatprep.subr.mxu0 0.0
  %1441 = vmatpush2.msra.mxu0 0.0
  %1442 = vmatprep.subr.mxu0 0.0
  %1443 = vmatpush2.msra.mxu0 0.0
  %1444 = vmatprep.subr.mxu0 0.0
  %1445 = vmatpush2.msra.mxu0 0.0
  %1446 = vmatprep.subr.mxu0 0.0
  %1447 = vmatpush2.msra.mxu0 0.0
  %1448 = vmatprep.subr.mxu0 0.0
  %1449 = vmatpush2.msra.mxu0 0.0
  %1450 = vmatprep.subr.mxu0 0.0
  %1451 = vmatpush2.msra.mxu0 0.0
  %1452 = vmatprep.subr.mxu0 0.0
  %1453 = vmatpush2.msra.mxu0 0.0
  %1454 = vmatprep.subr.mxu0 0.0
  %1455 = vmatpush2.msra.mxu0 0.0
  %1456 = vmatprep.subr.mxu0 0.0
  %1457 = vmatpush2.msra.mxu0 0.0
  %1458 = vmatprep.subr.mxu0 0.0
  %1459 = vmatpush2.msra.mxu0 0.0
  %1460 = vmatprep.subr.mxu0 0.0
  %1461 = vmatpush2.msra.mxu0 0.0
  %1462 = vmatprep.subr.mxu0 0.0
  %1463 = vmatpush2.msra.mxu0 0.0
  %1464 = vmatprep.subr.mxu0 0.0
  %1465 = vmatpush2.msra.mxu0 0.0
  %1466 = vmatprep.mubr.f32.mxu0 0.0
  %1467 = vmatmul.mubr.f32.gmra.mxu0 %v827
  %v1468 = vpop.f32.mrf.mxu0
  %v1469 = vadd.f32 %v1392, %v1468
  %v1470 = vpop.f32.mrf.mxu0
  %v1471 = vadd.f32 %v1394, %v1470
  %1472 = vdwg.mxu0
  %v1473 = vmul.f32 %v1469, %v1302
  %v1474 = vmul.f32 %v1471, %v1302
  %v1475 = vadd.f32 %v1473, %v1309
  %v1476 = vadd.f32 %v1474, %v1309
  %v1477 = vmax.f32 %v1475, 0.0
  %v1478 = vmax.f32 %v1476, 0.0
  %s1479 = scalar_lea.vmem %s6, 16
  %1480 = vst [vmem:[%s1479] sm:$0xff] %v1477
  %1481 = vst.msk [vmem:[%s1479 + $0x8] sm:$0xff] %vm31, %v1478
  // Predicated region
  $region26: #{fourier_unit_forward.1} parent=0 // pred_check
    _
  $region27: #{fourier_unit_forward.1} parent=0 // pred_check_branch
    %1483 = sbr.rel (0) target = $region29
  $region28: #{fourier_unit_forward.1} parent=0 // pred_region
    _
  $region29: #{fourier_unit_forward.1} parent=0 // pred_fallthru
    _
  // Predicated region
  $region30: #{fourier_unit_forward.1} parent=0 // pred_check
    _
  $region31: #{fourier_unit_forward.1} parent=0 // pred_check_branch
    %1485 = sbr.rel (0) target = $region33
  $region32: #{fourier_unit_forward.1} parent=0 // pred_region
    _
  $region33: #{fourier_unit_forward.1} parent=0 // pred_fallthru
    _

</llo_original>
